<compile_context>
chip_gen: v7x
topology: tpu7x:2x2x1
jax: 0.10.0
libtpu: 0.0.40
codegen_flags: <defaults>
</compile_context>

<pallas_src>
import functools

import jax
import jax.numpy as jnp
from jax.experimental import pallas as pl
from jax.experimental.pallas import tpu as pltpu


_TARGET_TILE_BYTES = 12 * 1024 * 1024   # per x tile (double-buffered in pipeline)
_MAX_LANE_GROUPS = 256                  # caps the unrolled 128-lane accumulate loop


def _fc_epilogue(avg, mx, w1_ref, w2_ref, o_ref):
    """avg, mx: (rows, C) f32 pooled vectors -> sigmoid(fc2(relu(fc1(.)))+...)."""
    w1 = w1_ref[...].astype(jnp.float32)            # (C_hid, C)
    w2 = w2_ref[...].astype(jnp.float32)            # (C, C_hid)
    dn = (((1,), (1,)), ((), ()))                   # contract last dims, no batch
    h_avg = jnp.maximum(
        jax.lax.dot_general(avg, w1, dn, precision=jax.lax.Precision.HIGHEST,
                            preferred_element_type=jnp.float32), 0.0)
    h_max = jnp.maximum(
        jax.lax.dot_general(mx, w1, dn, precision=jax.lax.Precision.HIGHEST,
                            preferred_element_type=jnp.float32), 0.0)
    # fc2 is linear: fc2(h_avg) + fc2(h_max) == fc2(h_avg + h_max).
    y = jax.lax.dot_general(h_avg + h_max, w2, dn,
                            precision=jax.lax.Precision.HIGHEST,
                            preferred_element_type=jnp.float32)   # (rows, C)
    # Lane-dense (rows, 1, C) store: unmasked full-lane row per batch element.
    o_ref[...] = jax.nn.sigmoid(y)[:, None, :].astype(o_ref.dtype)


def _channel_attn_kernel(x_ref, w1_ref, w2_ref, o_ref, *scratch,
                         hw, thw, num_k, needs_mask):
    if num_k == 1:
        # Whole spatial extent in one tile (possibly several batch elements):
        # reduce directly (cross-lane reduce happens once per block) and run
        # the FC epilogue.
        x = x_ref[...]                                            # (BN, C, HW)
        s = jnp.sum(x, axis=-1, dtype=jnp.float32)                # (BN, C)
        m = jnp.max(x, axis=-1).astype(jnp.float32)               # (BN, C)
        _fc_epilogue(s * (1.0 / hw), m, w1_ref, w2_ref, o_ref)
        return

    sum_ref, max_ref = scratch               # (1, C, 128): f32 / input dtype
    k = pl.program_id(1)
    nk = pl.num_programs(1)

    @pl.when(k == 0)
    def _init():
        sum_ref[...] = jnp.zeros_like(sum_ref)
        max_ref[...] = jnp.full_like(max_ref, -jnp.inf)

    groups = thw // 128

    def accumulate(masked):
        # Lane-wise VPU accumulation: one add + one max per x vreg, no
        # cross-lane (XLU) work and no MXU dot on the streaming path.
        s = sum_ref[...]                                          # (1, C, 128)
        m = max_ref[...]
        if masked:
            lane = jax.lax.broadcasted_iota(jnp.int32, (1, 1, 128), 2)
            base = k * thw
        for j in range(groups):
            lo = j * 128
            sl = x_ref[:, :, lo:lo + 128]                         # (1, C, 128)
            if masked:
                valid = (base + lo + lane) < hw
                sl_s = jnp.where(valid, sl, jnp.zeros((), sl.dtype))
                sl_m = jnp.where(valid, sl, jnp.array(-jnp.inf, sl.dtype))
            else:
                sl_s = sl
                sl_m = sl
            s = s + sl_s.astype(jnp.float32)      # exact f32 VPU accumulation
            m = jnp.maximum(m, sl_m)              # max stays in input dtype
        sum_ref[...] = s
        max_ref[...] = m

    if needs_mask:
        # Mask only the last (partial) spatial tile; full tiles pay no selects.
        @pl.when(k < nk - 1)
        def _full_tiles():
            accumulate(False)

        @pl.when(k == nk - 1)
        def _last_tile():
            accumulate(True)
    else:
        accumulate(False)

    @pl.when(k == nk - 1)
    def _finalize():
        # The only cross-lane reduces: once per batch element, over (C, 128).
        s = jnp.sum(sum_ref[...], axis=-1)                        # (1, C)
        m = jnp.max(max_ref[...], axis=-1).astype(jnp.float32)    # (1, C)
        _fc_epilogue(s * (1.0 / hw), m, w1_ref, w2_ref, o_ref)


def _plan(n, c, hw, itemsize, target_bytes, tile_hw):
    """Returns (batch_block, spatial_tile, num_spatial_tiles)."""
    if tile_hw is not None:
        thw = int(min(int(tile_hw), hw))
        if thw < hw and thw % 128 != 0:
            raise ValueError("tile_hw must be a multiple of 128 or >= H*W")
        return 1, thw, int(pl.cdiv(hw, thw))
    per_elem = c * hw * itemsize
    if per_elem <= target_bytes or hw <= 128:
        # Single-tile path: block several batch elements per grid step to
        # amortize per-step overhead for small feature maps.  (Half the
        # streaming target keeps room for the f32 reduce temporaries.)
        cap = max(1, (target_bytes // 2) // per_elem)
        bn = 1
        for d in range(1, n + 1):
            if n % d == 0 and d <= cap:
                bn = d
        return bn, hw, 1
    lanes = (target_bytes // (c * itemsize)) // 128 * 128
    lanes = max(128, min(lanes, _MAX_LANE_GROUPS * 128))
    thw = int(min(lanes, (hw // 128) * 128))
    num_k = int(pl.cdiv(hw, thw))
    if num_k == 1:          # hw barely above one tile: just take the full extent
        return 1, hw, 1
    return 1, thw, num_k


@functools.partial(jax.jit, static_argnames=("tile_hw", "target_bytes"))
def channel_attention(x, w1, w2, *, tile_hw=None,
                      target_bytes=_TARGET_TILE_BYTES):
    """x: (N, C, H, W); w1: (C_hid, C) fc1 weight; w2: (C, C_hid) fc2 weight.

    Returns (N, C, 1, 1) float32, matching the PyTorch ChannelAttention module.
    """
    n, c, h, w = x.shape
    c_hid = w1.shape[0]
    hw = h * w
    x_flat = x.reshape(n, c, hw)

    bn, thw, num_k = _plan(n, c, hw, x.dtype.itemsize, target_bytes, tile_hw)
    needs_mask = (hw % thw) != 0

    kernel = functools.partial(_channel_attn_kernel, hw=hw, thw=thw,
                               num_k=num_k, needs_mask=needs_mask)

    if num_k == 1:
        grid = (n // bn,)
        in_specs = [
            pl.BlockSpec((bn, c, hw), lambda i: (i, 0, 0)),
            pl.BlockSpec((c_hid, c), lambda i: (0, 0)),
            pl.BlockSpec((c, c_hid), lambda i: (0, 0)),
        ]
        out_specs = pl.BlockSpec((bn, 1, c), lambda i: (i, 0, 0))
        scratch_shapes = []
        dims = ("parallel",)
    else:
        # TODO(synk): for N == 1 on v7x, shard the spatial axis across the two
        # TensorCores (core-parallel leading axis / pl.core_map) with per-core
        # partial accumulators; with this layout one core idles when N == 1.
        grid = (n, num_k)
        in_specs = [
            pl.BlockSpec((1, c, thw), lambda i, k: (i, 0, k)),
            pl.BlockSpec((c_hid, c), lambda i, k: (0, 0)),
            pl.BlockSpec((c, c_hid), lambda i, k: (0, 0)),
        ]
        out_specs = pl.BlockSpec((1, 1, c), lambda i, k: (i, 0, 0))
        scratch_shapes = [
            pltpu.VMEM((1, c, 128), jnp.float32),   # lane-wise running sum
            pltpu.VMEM((1, c, 128), x.dtype),       # lane-wise running max
        ]
        dims = ("parallel", "arbitrary")

    out = pl.pallas_call(
        kernel,
        out_shape=jax.ShapeDtypeStruct((n, 1, c), jnp.float32),
        grid_spec=pltpu.PrefetchScalarGridSpec(
            num_scalar_prefetch=0,
            grid=grid,
            in_specs=in_specs,
            out_specs=out_specs,
            scratch_shapes=scratch_shapes,
        ),
        compiler_params=pltpu.CompilerParams(
            dimension_semantics=dims,
            vmem_limit_bytes=48 * 1024 * 1024,
        ),
    )(x_flat, w1, w2)

    return out.reshape(n, c, 1, 1)


def _reference(x, w1, w2):
    # Pure-JAX reference mirroring the PyTorch forward (in f32).
    xf = x.astype(jnp.float32)
    avg = jnp.mean(xf, axis=(2, 3))                               # (N, C)
    mx = jnp.max(xf, axis=(2, 3))                                 # (N, C)

    def branch(p):
        return jnp.maximum(p @ w1.T, 0.0) @ w2.T

    return jax.nn.sigmoid(branch(avg) + branch(mx))[:, :, None, None]


if __name__ == "__main__":
    key = jax.random.PRNGKey(0)
    kx1, kx2, k1, k2 = jax.random.split(key, 4)

    # Shapes consistent with the module (ratio=1 => C_hid == C).
    N, C, H, W = 2, 8, 16, 16
    C_hid = C
    x = jax.random.normal(kx1, (N, C, H, W), dtype=jnp.float32)
    w1 = jax.random.normal(k1, (C_hid, C), dtype=jnp.float32) * (1.0 / jnp.sqrt(C))
    w2 = jax.random.normal(k2, (C, C_hid), dtype=jnp.float32) * (1.0 / jnp.sqrt(C_hid))

    # 1) Single-tile / batch-blocked path (BN = 2, grid = (1,)).
    out = channel_attention(x, w1, w2)
    jax.block_until_ready(out)
    assert out.shape == (N, C, 1, 1)
    assert jnp.allclose(out, _reference(x, w1, w2), atol=1e-5, rtol=1e-5), \
        "mismatch (single-tile path)"

    # 2) Multi-tile path with a partial (masked) last tile: HW = 400, THW = 128,
    #    exercising the lane-wise VPU accumulators and the pl.when mask split.
    x2 = jax.random.normal(kx2, (N, C, 20, 20), dtype=jnp.float32)
    out2 = channel_attention(x2, w1, w2, tile_hw=128)
    jax.block_until_ready(out2)
    assert jnp.allclose(out2, _reference(x2, w1, w2), atol=1e-5, rtol=1e-5), \
        "mismatch (multi-tile masked path)"

    # 3) Same multi-tile path with a bf16 input (running max stays bf16;
    #    only the sum path upcasts to f32).
    x3 = x2.astype(jnp.bfloat16)
    out3 = channel_attention(x3, w1, w2, tile_hw=128)
    jax.block_until_ready(out3)
    assert jnp.allclose(out3, _reference(x3, w1, w2), atol=1e-3, rtol=1e-3), \
        "mismatch (bf16 multi-tile path)"

    print("KERNEL_OK")
</pallas_src>

<mosaic_0001>
module attributes {stable_mosaic.version = 11 : i64} {
  func.func @_channel_attn_kernel(%arg0: i32, %arg1: memref<2x8x256xf32, #tpu.memory_space<vmem>>, %arg2: memref<8x8xf32, #tpu.memory_space<vmem>>, %arg3: memref<8x8xf32, #tpu.memory_space<vmem>>, %arg4: memref<2x1x8xf32, #tpu.memory_space<vmem>>) attributes {dimension_semantics = [#tpu.dimension_semantics<parallel>], iteration_bounds = array<i64: 1>, scalar_prefetch = 0 : i64, scratch_operands = 0 : i64, tpu.core_type = #tpu.core_type<tc>, window_params = [{transform_indices = @transform_0, window_bounds = array<i64: 2, 8, 256>}, {pipeline_mode = #tpu.pipeline_mode<synchronous>, transform_indices = @transform_1, window_bounds = array<i64: 8, 8>}, {pipeline_mode = #tpu.pipeline_mode<synchronous>, transform_indices = @transform_2, window_bounds = array<i64: 8, 8>}, {transform_indices = @transform_3, window_bounds = array<i64: 2, 1, 8>}]} {
    %c0 = arith.constant 0 : index
    %c0_0 = arith.constant 0 : index
    %c0_1 = arith.constant 0 : index
    %0 = vector.load %arg1[%c0, %c0_0, %c0_1] : memref<2x8x256xf32, #tpu.memory_space<vmem>>, vector<2x8x256xf32>
    %cst = arith.constant dense<0.000000e+00> : vector<2x8xf32>
    %1 = vector.multi_reduction <add>, %0, %cst [2] : vector<2x8x256xf32> to vector<2x8xf32>
    %cst_2 = arith.constant dense<0xFF800000> : vector<2x8xf32>
    %2 = vector.multi_reduction <maximumf>, %0, %cst_2 [2] : vector<2x8x256xf32> to vector<2x8xf32>
    %cst_3 = arith.constant 3.906250e-03 : f32
    %3 = vector.broadcast %cst_3 : f32 to vector<2x8xf32>
    %4 = arith.mulf %1, %3 : vector<2x8xf32>
    %c0_4 = arith.constant 0 : index
    %c0_5 = arith.constant 0 : index
    %5 = vector.load %arg2[%c0_4, %c0_5] : memref<8x8xf32, #tpu.memory_space<vmem>>, vector<8x8xf32>
    %c0_6 = arith.constant 0 : index
    %c0_7 = arith.constant 0 : index
    %6 = vector.load %arg3[%c0_6, %c0_7] : memref<8x8xf32, #tpu.memory_space<vmem>>, vector<8x8xf32>
    %cst_8 = arith.constant dense<0.000000e+00> : vector<2x8xf32>
    %7 = tpu.matmul %4, %5, %cst_8 {dimension_numbers = #tpu.dot_dimension_numbers<[1], [1], [0], [0], [0, 0, 1, 0], [], []>, precision = #tpu.contract_precision<fp32>} : vector<2x8xf32>, vector<8x8xf32>, vector<2x8xf32> -> vector<2x8xf32>
    %cst_9 = arith.constant 0.000000e+00 : f32
    %8 = vector.broadcast %cst_9 : f32 to vector<2x8xf32>
    %9 = arith.maximumf %7, %8 : vector<2x8xf32>
    %cst_10 = arith.constant dense<0.000000e+00> : vector<2x8xf32>
    %10 = tpu.matmul %2, %5, %cst_10 {dimension_numbers = #tpu.dot_dimension_numbers<[1], [1], [0], [0], [0, 0, 1, 0], [], []>, precision = #tpu.contract_precision<fp32>} : vector<2x8xf32>, vector<8x8xf32>, vector<2x8xf32> -> vector<2x8xf32>
    %cst_11 = arith.constant 0.000000e+00 : f32
    %11 = vector.broadcast %cst_11 : f32 to vector<2x8xf32>
    %12 = arith.maximumf %10, %11 : vector<2x8xf32>
    %13 = arith.addf %9, %12 : vector<2x8xf32>
    %cst_12 = arith.constant dense<0.000000e+00> : vector<2x8xf32>
    %14 = tpu.matmul %13, %6, %cst_12 {dimension_numbers = #tpu.dot_dimension_numbers<[1], [1], [0], [0], [0, 0, 1, 0], [], []>, precision = #tpu.contract_precision<fp32>} : vector<2x8xf32>, vector<8x8xf32>, vector<2x8xf32> -> vector<2x8xf32>
    %15 = arith.negf %14 : vector<2x8xf32>
    %16 = math.exp %15 : vector<2x8xf32>
    %cst_13 = arith.constant 1.000000e+00 : f32
    %17 = vector.broadcast %cst_13 : f32 to vector<2x8xf32>
    %18 = arith.addf %17, %16 : vector<2x8xf32>
    %19 = arith.divf %17, %18 : vector<2x8xf32>
    %20 = vector.shape_cast %19 : vector<2x8xf32> to vector<2x1x8xf32>
    %c0_14 = arith.constant 0 : index
    %c0_15 = arith.constant 0 : index
    %c0_16 = arith.constant 0 : index
    %21 = vector.load %arg4[%c0_14, %c0_15, %c0_16] : memref<2x1x8xf32, #tpu.memory_space<vmem>>, vector<2x1x8xf32>
    tpu.vector_store %arg4[%c0_14, %c0_15, %c0_16], %20 {strides = array<i32>} : memref<2x1x8xf32, #tpu.memory_space<vmem>>, vector<2x1x8xf32>,
    return
  }
  func.func @transform_0(%arg0: i32) -> (i32, i32, i32) {
    %c0_i32 = arith.constant 0 : i32
    %c0_i32_0 = arith.constant 0 : i32
    %c0_i32_1 = arith.constant 0 : i32
    return %arg0, %c0_i32, %c0_i32_0 : i32, i32, i32
  }
  func.func @transform_1(%arg0: i32) -> (i32, i32) {
    %c0_i32 = arith.constant 0 : i32
    %c0_i32_0 = arith.constant 0 : i32
    %c0_i32_1 = arith.constant 0 : i32
    return %c0_i32, %c0_i32_0 : i32, i32
  }
  func.func @transform_2(%arg0: i32) -> (i32, i32) {
    %c0_i32 = arith.constant 0 : i32
    %c0_i32_0 = arith.constant 0 : i32
    %c0_i32_1 = arith.constant 0 : i32
    return %c0_i32, %c0_i32_0 : i32, i32
  }
  func.func @transform_3(%arg0: i32) -> (i32, i32, i32) {
    %c0_i32 = arith.constant 0 : i32
    %c0_i32_0 = arith.constant 0 : i32
    %c0_i32_1 = arith.constant 0 : i32
    return %arg0, %c0_i32, %c0_i32_0 : i32, i32, i32
  }
}

</mosaic_0001>

<llo_original>
// kernel: channel_attention.1
$region0: #{channel_attention.1}
  #allocation0 [shape = 'u32[]', space=smem, size = 0x4, offset = 0x4, fixed_abs, tag = 'smem constant byte address 0x4 - core index']
  #allocation1 [shape = 'u32[144,128]{1,0:T(1,128)}', space=vmem, size = 0x12000, scoped, tag = 'internal scratch']
  %s0 = inlined_call_operand.vmem [shape: f32[2,8,256], index: 0, kind: input, shape index: {}]
  %s1 = inlined_call_operand.vmem [shape: f32[8,8], index: 1, kind: input, shape index: {}]
  %s2 = inlined_call_operand.vmem [shape: f32[8,8], index: 2, kind: input, shape index: {}]
  %s3 = inlined_call_operand.hbm [shape: f32[2,1,8], index: 3, kind: output, shape index: {}]
  %s4 = sld [smem:[#allocation0]]
  $region22: #{channel_attention.1} parent=0
    _
  %s6 = ssub.s32 1, %s4
  %s7 = scalar_select 0, %s6, %s4
  $region1: #{channel_attention.1} parent=0
    #allocation2 [shape = 'u8[1024]{0}', space=vmem, size = 0x400, scoped, tag = 'output window, operand 0, single buffered']
    #allocation3 [shape = 's32[1]{0}', space=sflag, size = 0x4, scoped, tag = 'scoped memory for channel_attention.1']
    %8 = vsyncpa [#allocation3], 0
    // Predicated region
    $region2: #{channel_attention.1} parent=1 // pred_check
      _
    $region3: #{channel_attention.1} parent=1 // pred_check_branch
      %10 = sbr.rel (0) target = $region5
    $region4: #{channel_attention.1} parent=1 // pred_region
      _
    $region5: #{channel_attention.1} parent=1 // pred_fallthru
      _
    // Predicated region
    $region6: #{channel_attention.1} parent=1 // pred_check
      _
    $region7: #{channel_attention.1} parent=1 // pred_check_branch
      %12 = sbr.rel (0) target = $region9
    $region8: #{channel_attention.1} parent=1 // pred_region
      _
    $region9: #{channel_attention.1} parent=1 // pred_fallthru
      _
    // Predicated region
    $region10: #{channel_attention.1} parent=1 // pred_check
      _
    $region11: #{channel_attention.1} parent=1 // pred_check_branch
      %14 = sbr.rel (0) target = $region13
    $region12: #{channel_attention.1} parent=1 // pred_region
      _
    $region13: #{channel_attention.1} parent=1 // pred_fallthru
      _
    %v15 = vld [vmem:[%s0] sm:$0xff]
    %v16 = vld [vmem:[%s0 + $0x8] sm:$0xff]
    %v17 = vld [vmem:[%s0 + $0x10] sm:$0xff]
    %v18 = vld [vmem:[%s0 + $0x18] sm:$0xff]
    %v19 = vadd.f32 %v15, %v16
    %20 = vadd.xlane.f32.xlu0 %v19
    %v21 = vpop.xlane.xlu0 %20
    %v22 = vadd.f32 %v17, %v18
    %23 = vadd.xlane.f32.xlu0 %v22
    %v24 = vpop.xlane.xlu0 %23
    %v25 = vmax.f32 %v15, %v16
    %26 = vmax.xlane.f32.xlu0 %v25
    %v27 = vpop.xlane.xlu0 %26
    %v28 = vmax.f32 %v17, %v18
    %29 = vmax.xlane.f32.xlu0 %v28
    %v30 = vpop.xlane.xlu0 %29
    %v31 = vmul.f32 %v21, 0.00390625
    %v32 = vmul.f32 %v24, 0.00390625
    %v33 = vld [vmem:[%s1] sm:$0xff]
    %v34 = vld [vmem:[%s2] sm:$0xff]
    %v37 = vlaneseq
    %v38 = vand.u32 %v37, 127
    %v39 = vlaneseq
    %v40 = vshrl.u32 %v39, 7
    %v41 = vsub.s32 %v38, %v40
    %v42 = vrot.slane %v31, %v41
    %v43 = vlaneseq
    %v44 = vshrl.u32 %v43, 7
    %v45 = vsub.s32 %v38, %v44
    %v46 = vrot.slane %v32, %v45
    %vm47 = vcmask 1041409
    %v48 = vsel %vm47, %v46, %v42
    %vm49 = vcmask 64512
    %v50 = vsel %vm49, %v48, 0
    %v53 = vsel %vm49, %v33, 0
    %55 = vmatprep.subr.mxu0 0.0
    %v56 = vand.u32 %v53, 4294901760
    %57 = vmatpush1.xpose.msra.mxu0 %v56
    %58 = vmatprep.subr.mxu0 0.0
    %59 = vmatpush1.xpose.msra.mxu0 0.0
    %60 = vmatprep.subr.mxu0 0.0
    %61 = vmatpush1.xpose.msra.mxu0 0.0
    %62 = vmatprep.subr.mxu0 0.0
    %63 = vmatpush1.xpose.msra.mxu0 0.0
    %64 = vmatprep.subr.mxu0 0.0
    %65 = vmatpush1.xpose.msra.mxu0 0.0
    %66 = vmatprep.subr.mxu0 0.0
    %67 = vmatpush1.xpose.msra.mxu0 0.0
    %68 = vmatprep.subr.mxu0 0.0
    %69 = vmatpush1.xpose.msra.mxu0 0.0
    %70 = vmatprep.subr.mxu0 0.0
    %71 = vmatpush1.xpose.msra.mxu0 0.0
    %72 = vmatprep.subr.mxu0 0.0
    %73 = vmatpush1.xpose.msra.mxu0 0.0
    %74 = vmatprep.subr.mxu0 0.0
    %75 = vmatpush1.xpose.msra.mxu0 0.0
    %76 = vmatprep.subr.mxu0 0.0
    %77 = vmatpush1.xpose.msra.mxu0 0.0
    %78 = vmatprep.subr.mxu0 0.0
    %79 = vmatpush1.xpose.msra.mxu0 0.0
    %80 = vmatprep.subr.mxu0 0.0
    %81 = vmatpush1.xpose.msra.mxu0 0.0
    %82 = vmatprep.subr.mxu0 0.0
    %83 = vmatpush1.xpose.msra.mxu0 0.0
    %84 = vmatprep.subr.mxu0 0.0
    %85 = vmatpush1.xpose.msra.mxu0 0.0
    %86 = vmatprep.subr.mxu0 0.0
    %87 = vmatpush1.xpose.msra.mxu0 0.0
    %88 = vmatprep.subr.mxu0 0.0
    %89 = vmatpush1.xpose.msra.mxu0 0.0
    %90 = vmatprep.subr.mxu0 0.0
    %91 = vmatpush1.xpose.msra.mxu0 0.0
    %92 = vmatprep.subr.mxu0 0.0
    %93 = vmatpush1.xpose.msra.mxu0 0.0
    %94 = vmatprep.subr.mxu0 0.0
    %95 = vmatpush1.xpose.msra.mxu0 0.0
    %96 = vmatprep.subr.mxu0 0.0
    %97 = vmatpush1.xpose.msra.mxu0 0.0
    %98 = vmatprep.subr.mxu0 0.0
    %99 = vmatpush1.xpose.msra.mxu0 0.0
    %100 = vmatprep.subr.mxu0 0.0
    %101 = vmatpush1.xpose.msra.mxu0 0.0
    %102 = vmatprep.subr.mxu0 0.0
    %103 = vmatpush1.xpose.msra.mxu0 0.0
    %104 = vmatprep.subr.mxu0 0.0
    %105 = vmatpush1.xpose.msra.mxu0 0.0
    %106 = vmatprep.subr.mxu0 0.0
    %107 = vmatpush1.xpose.msra.mxu0 0.0
    %108 = vmatprep.subr.mxu0 0.0
    %109 = vmatpush1.xpose.msra.mxu0 0.0
    %110 = vmatprep.subr.mxu0 0.0
    %111 = vmatpush1.xpose.msra.mxu0 0.0
    %112 = vmatprep.subr.mxu0 0.0
    %113 = vmatpush1.xpose.msra.mxu0 0.0
    %114 = vmatprep.subr.mxu0 0.0
    %115 = vmatpush1.xpose.msra.mxu0 0.0
    %116 = vmatprep.subr.mxu0 0.0
    %117 = vmatpush1.xpose.msra.mxu0 0.0
    %118 = vmatprep.subr.mxu0 0.0
    %119 = vmatpush1.xpose.msra.mxu0 0.0
    %120 = vmatprep.mubr.f32.mxu0 0.0
    %v121 = vand.u32 %v50, 4294901760
    %v122 = vsub.f32 %v50, %v121
    %v123 = vand.u32 %v122, 4294901760
    %v124 = vsub.f32 %v122, %v123
    %v125 = vand.u32 %v124, 4294901760
    %126 = vmatmul.mubr.f32.gmra.mrb[0].mxu0 %v125
    %v127 = vpop.f32.mrb[0].mxu0
    %v128 = vadd.f32 0.0, %v127
    %v129 = vpop.f32.mrb[0].mxu0
    %130 = vdwg.mxu0
    %131 = vmatprep.subr.mxu0 0.0
    %v132 = vand.u32 %v53, 4294901760
    %v133 = vsub.f32 %v53, %v132
    %v134 = vand.u32 %v133, 4294901760
    %v135 = vsub.f32 %v133, %v134
    %v136 = vand.u32 %v135, 4294901760
    %137 = vmatpush1.xpose.msra.mxu0 %v136
    %138 = vmatprep.subr.mxu0 0.0
    %139 = vmatpush1.xpose.msra.mxu0 0.0
    %140 = vmatprep.subr.mxu0 0.0
    %141 = vmatpush1.xpose.msra.mxu0 0.0
    %142 = vmatprep.subr.mxu0 0.0
    %143 = vmatpush1.xpose.msra.mxu0 0.0
    %144 = vmatprep.subr.mxu0 0.0
    %145 = vmatpush1.xpose.msra.mxu0 0.0
    %146 = vmatprep.subr.mxu0 0.0
    %147 = vmatpush1.xpose.msra.mxu0 0.0
    %148 = vmatprep.subr.mxu0 0.0
    %149 = vmatpush1.xpose.msra.mxu0 0.0
    %150 = vmatprep.subr.mxu0 0.0
    %151 = vmatpush1.xpose.msra.mxu0 0.0
    %152 = vmatprep.subr.mxu0 0.0
    %153 = vmatpush1.xpose.msra.mxu0 0.0
    %154 = vmatprep.subr.mxu0 0.0
    %155 = vmatpush1.xpose.msra.mxu0 0.0
    %156 = vmatprep.subr.mxu0 0.0
    %157 = vmatpush1.xpose.msra.mxu0 0.0
    %158 = vmatprep.subr.mxu0 0.0
    %159 = vmatpush1.xpose.msra.mxu0 0.0
    %160 = vmatprep.subr.mxu0 0.0
    %161 = vmatpush1.xpose.msra.mxu0 0.0
    %162 = vmatprep.subr.mxu0 0.0
    %163 = vmatpush1.xpose.msra.mxu0 0.0
    %164 = vmatprep.subr.mxu0 0.0
    %165 = vmatpush1.xpose.msra.mxu0 0.0
    %166 = vmatprep.subr.mxu0 0.0
    %167 = vmatpush1.xpose.msra.mxu0 0.0
    %168 = vmatprep.subr.mxu0 0.0
    %169 = vmatpush1.xpose.msra.mxu0 0.0
    %170 = vmatprep.subr.mxu0 0.0
    %171 = vmatpush1.xpose.msra.mxu0 0.0
    %172 = vmatprep.subr.mxu0 0.0
    %173 = vmatpush1.xpose.msra.mxu0 0.0
    %174 = vmatprep.subr.mxu0 0.0
    %175 = vmatpush1.xpose.msra.mxu0 0.0
    %176 = vmatprep.subr.mxu0 0.0
    %177 = vmatpush1.xpose.msra.mxu0 0.0
    %178 = vmatprep.subr.mxu0 0.0
    %179 = vmatpush1.xpose.msra.mxu0 0.0
    %180 = vmatprep.subr.mxu0 0.0
    %181 = vmatpush1.xpose.msra.mxu0 0.0
    %182 = vmatprep.subr.mxu0 0.0
    %183 = vmatpush1.xpose.msra.mxu0 0.0
    %184 = vmatprep.subr.mxu0 0.0
    %185 = vmatpush1.xpose.msra.mxu0 0.0
    %186 = vmatprep.subr.mxu0 0.0
    %187 = vmatpush1.xpose.msra.mxu0 0.0
    %188 = vmatprep.subr.mxu0 0.0
    %189 = vmatpush1.xpose.msra.mxu0 0.0
    %190 = vmatprep.subr.mxu0 0.0
    %191 = vmatpush1.xpose.msra.mxu0 0.0
    %192 = vmatprep.subr.mxu0 0.0
    %193 = vmatpush1.xpose.msra.mxu0 0.0
    %194 = vmatprep.subr.mxu0 0.0
    %195 = vmatpush1.xpose.msra.mxu0 0.0
    %196 = vmatprep.subr.mxu0 0.0
    %197 = vmatpush1.xpose.msra.mxu0 0.0
    %198 = vmatprep.subr.mxu0 0.0
    %199 = vmatpush1.xpose.msra.mxu0 0.0
    %200 = vmatprep.mubr.f32.mxu0 0.0
    %v201 = vand.u32 %v50, 4294901760
    %202 = vmatmul.mubr.f32.gmra.mrb[0].mxu0 %v201
    %v203 = vpop.f32.mrb[0].mxu0
    %v204 = vadd.f32 %v128, %v203
    %v205 = vpop.f32.mrb[0].mxu0
    %206 = vdwg.mxu0
    %207 = vmatprep.subr.mxu0 0.0
    %v208 = vand.u32 %v53, 4294901760
    %v209 = vsub.f32 %v53, %v208
    %210 = vmatpush1.xpose.msra.mxu0 %v209
    %211 = vmatprep.subr.mxu0 0.0
    %212 = vmatpush1.xpose.msra.mxu0 0.0
    %213 = vmatprep.subr.mxu0 0.0
    %214 = vmatpush1.xpose.msra.mxu0 0.0
    %215 = vmatprep.subr.mxu0 0.0
    %216 = vmatpush1.xpose.msra.mxu0 0.0
    %217 = vmatprep.subr.mxu0 0.0
    %218 = vmatpush1.xpose.msra.mxu0 0.0
    %219 = vmatprep.subr.mxu0 0.0
    %220 = vmatpush1.xpose.msra.mxu0 0.0
    %221 = vmatprep.subr.mxu0 0.0
    %222 = vmatpush1.xpose.msra.mxu0 0.0
    %223 = vmatprep.subr.mxu0 0.0
    %224 = vmatpush1.xpose.msra.mxu0 0.0
    %225 = vmatprep.subr.mxu0 0.0
    %226 = vmatpush1.xpose.msra.mxu0 0.0
    %227 = vmatprep.subr.mxu0 0.0
    %228 = vmatpush1.xpose.msra.mxu0 0.0
    %229 = vmatprep.subr.mxu0 0.0
    %230 = vmatpush1.xpose.msra.mxu0 0.0
    %231 = vmatprep.subr.mxu0 0.0
    %232 = vmatpush1.xpose.msra.mxu0 0.0
    %233 = vmatprep.subr.mxu0 0.0
    %234 = vmatpush1.xpose.msra.mxu0 0.0
    %235 = vmatprep.subr.mxu0 0.0
    %236 = vmatpush1.xpose.msra.mxu0 0.0
    %237 = vmatprep.subr.mxu0 0.0
    %238 = vmatpush1.xpose.msra.mxu0 0.0
    %239 = vmatprep.subr.mxu0 0.0
    %240 = vmatpush1.xpose.msra.mxu0 0.0
    %241 = vmatprep.subr.mxu0 0.0
    %242 = vmatpush1.xpose.msra.mxu0 0.0
    %243 = vmatprep.subr.mxu0 0.0
    %244 = vmatpush1.xpose.msra.mxu0 0.0
    %245 = vmatprep.subr.mxu0 0.0
    %246 = vmatpush1.xpose.msra.mxu0 0.0
    %247 = vmatprep.subr.mxu0 0.0
    %248 = vmatpush1.xpose.msra.mxu0 0.0
    %249 = vmatprep.subr.mxu0 0.0
    %250 = vmatpush1.xpose.msra.mxu0 0.0
    %251 = vmatprep.subr.mxu0 0.0
    %252 = vmatpush1.xpose.msra.mxu0 0.0
    %253 = vmatprep.subr.mxu0 0.0
    %254 = vmatpush1.xpose.msra.mxu0 0.0
    %255 = vmatprep.subr.mxu0 0.0
    %256 = vmatpush1.xpose.msra.mxu0 0.0
    %257 = vmatprep.subr.mxu0 0.0
    %258 = vmatpush1.xpose.msra.mxu0 0.0
    %259 = vmatprep.subr.mxu0 0.0
    %260 = vmatpush1.xpose.msra.mxu0 0.0
    %261 = vmatprep.subr.mxu0 0.0
    %262 = vmatpush1.xpose.msra.mxu0 0.0
    %263 = vmatprep.subr.mxu0 0.0
    %264 = vmatpush1.xpose.msra.mxu0 0.0
    %265 = vmatprep.subr.mxu0 0.0
    %266 = vmatpush1.xpose.msra.mxu0 0.0
    %267 = vmatprep.subr.mxu0 0.0
    %268 = vmatpush1.xpose.msra.mxu0 0.0
    %269 = vmatprep.subr.mxu0 0.0
    %270 = vmatpush1.xpose.msra.mxu0 0.0
    %271 = vmatprep.subr.mxu0 0.0
    %272 = vmatpush1.xpose.msra.mxu0 0.0
    %273 = vmatprep.mubr.f32.mxu0 0.0
    %v274 = vand.u32 %v50, 4294901760
    %v275 = vsub.f32 %v50, %v274
    %276 = vmatmul.mubr.f32.gmra.mrb[0].mxu0 %v275
    %v277 = vpop.f32.mrb[0].mxu0
    %v278 = vadd.f32 %v204, %v277
    %v279 = vpop.f32.mrb[0].mxu0
    %280 = vdwg.mxu0
    %281 = vmatprep.subr.mxu0 0.0
    %v282 = vand.u32 %v53, 4294901760
    %283 = vmatpush1.xpose.msra.mxu0 %v282
    %284 = vmatprep.subr.mxu0 0.0
    %285 = vmatpush1.xpose.msra.mxu0 0.0
    %286 = vmatprep.subr.mxu0 0.0
    %287 = vmatpush1.xpose.msra.mxu0 0.0
    %288 = vmatprep.subr.mxu0 0.0
    %289 = vmatpush1.xpose.msra.mxu0 0.0
    %290 = vmatprep.subr.mxu0 0.0
    %291 = vmatpush1.xpose.msra.mxu0 0.0
    %292 = vmatprep.subr.mxu0 0.0
    %293 = vmatpush1.xpose.msra.mxu0 0.0
    %294 = vmatprep.subr.mxu0 0.0
    %295 = vmatpush1.xpose.msra.mxu0 0.0
    %296 = vmatprep.subr.mxu0 0.0
    %297 = vmatpush1.xpose.msra.mxu0 0.0
    %298 = vmatprep.subr.mxu0 0.0
    %299 = vmatpush1.xpose.msra.mxu0 0.0
    %300 = vmatprep.subr.mxu0 0.0
    %301 = vmatpush1.xpose.msra.mxu0 0.0
    %302 = vmatprep.subr.mxu0 0.0
    %303 = vmatpush1.xpose.msra.mxu0 0.0
    %304 = vmatprep.subr.mxu0 0.0
    %305 = vmatpush1.xpose.msra.mxu0 0.0
    %306 = vmatprep.subr.mxu0 0.0
    %307 = vmatpush1.xpose.msra.mxu0 0.0
    %308 = vmatprep.subr.mxu0 0.0
    %309 = vmatpush1.xpose.msra.mxu0 0.0
    %310 = vmatprep.subr.mxu0 0.0
    %311 = vmatpush1.xpose.msra.mxu0 0.0
    %312 = vmatprep.subr.mxu0 0.0
    %313 = vmatpush1.xpose.msra.mxu0 0.0
    %314 = vmatprep.subr.mxu0 0.0
    %315 = vmatpush1.xpose.msra.mxu0 0.0
    %316 = vmatprep.subr.mxu0 0.0
    %317 = vmatpush1.xpose.msra.mxu0 0.0
    %318 = vmatprep.subr.mxu0 0.0
    %319 = vmatpush1.xpose.msra.mxu0 0.0
    %320 = vmatprep.subr.mxu0 0.0
    %321 = vmatpush1.xpose.msra.mxu0 0.0
    %322 = vmatprep.subr.mxu0 0.0
    %323 = vmatpush1.xpose.msra.mxu0 0.0
    %324 = vmatprep.subr.mxu0 0.0
    %325 = vmatpush1.xpose.msra.mxu0 0.0
    %326 = vmatprep.subr.mxu0 0.0
    %327 = vmatpush1.xpose.msra.mxu0 0.0
    %328 = vmatprep.subr.mxu0 0.0
    %329 = vmatpush1.xpose.msra.mxu0 0.0
    %330 = vmatprep.subr.mxu0 0.0
    %331 = vmatpush1.xpose.msra.mxu0 0.0
    %332 = vmatprep.subr.mxu0 0.0
    %333 = vmatpush1.xpose.msra.mxu0 0.0
    %334 = vmatprep.subr.mxu0 0.0
    %335 = vmatpush1.xpose.msra.mxu0 0.0
    %336 = vmatprep.subr.mxu0 0.0
    %337 = vmatpush1.xpose.msra.mxu0 0.0
    %338 = vmatprep.subr.mxu0 0.0
    %339 = vmatpush1.xpose.msra.mxu0 0.0
    %340 = vmatprep.subr.mxu0 0.0
    %341 = vmatpush1.xpose.msra.mxu0 0.0
    %342 = vmatprep.subr.mxu0 0.0
    %343 = vmatpush1.xpose.msra.mxu0 0.0
    %344 = vmatprep.subr.mxu0 0.0
    %345 = vmatpush1.xpose.msra.mxu0 0.0
    %346 = vmatprep.mubr.f32.mxu0 0.0
    %v347 = vand.u32 %v50, 4294901760
    %v348 = vsub.f32 %v50, %v347
    %v349 = vand.u32 %v348, 4294901760
    %350 = vmatmul.mubr.f32.gmra.mrb[0].mxu0 %v349
    %v351 = vpop.f32.mrb[0].mxu0
    %v352 = vadd.f32 %v278, %v351
    %v353 = vpop.f32.mrb[0].mxu0
    %354 = vdwg.mxu0
    %355 = vmatprep.subr.mxu0 0.0
    %v356 = vand.u32 %v53, 4294901760
    %v357 = vsub.f32 %v53, %v356
    %v358 = vand.u32 %v357, 4294901760
    %359 = vmatpush1.xpose.msra.mxu0 %v358
    %360 = vmatprep.subr.mxu0 0.0
    %361 = vmatpush1.xpose.msra.mxu0 0.0
    %362 = vmatprep.subr.mxu0 0.0
    %363 = vmatpush1.xpose.msra.mxu0 0.0
    %364 = vmatprep.subr.mxu0 0.0
    %365 = vmatpush1.xpose.msra.mxu0 0.0
    %366 = vmatprep.subr.mxu0 0.0
    %367 = vmatpush1.xpose.msra.mxu0 0.0
    %368 = vmatprep.subr.mxu0 0.0
    %369 = vmatpush1.xpose.msra.mxu0 0.0
    %370 = vmatprep.subr.mxu0 0.0
    %371 = vmatpush1.xpose.msra.mxu0 0.0
    %372 = vmatprep.subr.mxu0 0.0
    %373 = vmatpush1.xpose.msra.mxu0 0.0
    %374 = vmatprep.subr.mxu0 0.0
    %375 = vmatpush1.xpose.msra.mxu0 0.0
    %376 = vmatprep.subr.mxu0 0.0
    %377 = vmatpush1.xpose.msra.mxu0 0.0
    %378 = vmatprep.subr.mxu0 0.0
    %379 = vmatpush1.xpose.msra.mxu0 0.0
    %380 = vmatprep.subr.mxu0 0.0
    %381 = vmatpush1.xpose.msra.mxu0 0.0
    %382 = vmatprep.subr.mxu0 0.0
    %383 = vmatpush1.xpose.msra.mxu0 0.0
    %384 = vmatprep.subr.mxu0 0.0
    %385 = vmatpush1.xpose.msra.mxu0 0.0
    %386 = vmatprep.subr.mxu0 0.0
    %387 = vmatpush1.xpose.msra.mxu0 0.0
    %388 = vmatprep.subr.mxu0 0.0
    %389 = vmatpush1.xpose.msra.mxu0 0.0
    %390 = vmatprep.subr.mxu0 0.0
    %391 = vmatpush1.xpose.msra.mxu0 0.0
    %392 = vmatprep.subr.mxu0 0.0
    %393 = vmatpush1.xpose.msra.mxu0 0.0
    %394 = vmatprep.subr.mxu0 0.0
    %395 = vmatpush1.xpose.msra.mxu0 0.0
    %396 = vmatprep.subr.mxu0 0.0
    %397 = vmatpush1.xpose.msra.mxu0 0.0
    %398 = vmatprep.subr.mxu0 0.0
    %399 = vmatpush1.xpose.msra.mxu0 0.0
    %400 = vmatprep.subr.mxu0 0.0
    %401 = vmatpush1.xpose.msra.mxu0 0.0
    %402 = vmatprep.subr.mxu0 0.0
    %403 = vmatpush1.xpose.msra.mxu0 0.0
    %404 = vmatprep.subr.mxu0 0.0
    %405 = vmatpush1.xpose.msra.mxu0 0.0
    %406 = vmatprep.subr.mxu0 0.0
    %407 = vmatpush1.xpose.msra.mxu0 0.0
    %408 = vmatprep.subr.mxu0 0.0
    %409 = vmatpush1.xpose.msra.mxu0 0.0
    %410 = vmatprep.subr.mxu0 0.0
    %411 = vmatpush1.xpose.msra.mxu0 0.0
    %412 = vmatprep.subr.mxu0 0.0
    %413 = vmatpush1.xpose.msra.mxu0 0.0
    %414 = vmatprep.subr.mxu0 0.0
    %415 = vmatpush1.xpose.msra.mxu0 0.0
    %416 = vmatprep.subr.mxu0 0.0
    %417 = vmatpush1.xpose.msra.mxu0 0.0
    %418 = vmatprep.subr.mxu0 0.0
    %419 = vmatpush1.xpose.msra.mxu0 0.0
    %420 = vmatprep.subr.mxu0 0.0
    %421 = vmatpush1.xpose.msra.mxu0 0.0
    %422 = vmatprep.mubr.f32.mxu0 0.0
    %v423 = vand.u32 %v50, 4294901760
    %424 = vmatmul.mubr.f32.gmra.mrb[0].mxu0 %v423
    %v425 = vpop.f32.mrb[0].mxu0
    %v426 = vadd.f32 %v352, %v425
    %v427 = vpop.f32.mrb[0].mxu0
    %428 = vdwg.mxu0
    %429 = vmatprep.subr.mxu0 0.0
    %v430 = vand.u32 %v53, 4294901760
    %431 = vmatpush1.xpose.msra.mxu0 %v430
    %432 = vmatprep.subr.mxu0 0.0
    %433 = vmatpush1.xpose.msra.mxu0 0.0
    %434 = vmatprep.subr.mxu0 0.0
    %435 = vmatpush1.xpose.msra.mxu0 0.0
    %436 = vmatprep.subr.mxu0 0.0
    %437 = vmatpush1.xpose.msra.mxu0 0.0
    %438 = vmatprep.subr.mxu0 0.0
    %439 = vmatpush1.xpose.msra.mxu0 0.0
    %440 = vmatprep.subr.mxu0 0.0
    %441 = vmatpush1.xpose.msra.mxu0 0.0
    %442 = vmatprep.subr.mxu0 0.0
    %443 = vmatpush1.xpose.msra.mxu0 0.0
    %444 = vmatprep.subr.mxu0 0.0
    %445 = vmatpush1.xpose.msra.mxu0 0.0
    %446 = vmatprep.subr.mxu0 0.0
    %447 = vmatpush1.xpose.msra.mxu0 0.0
    %448 = vmatprep.subr.mxu0 0.0
    %449 = vmatpush1.xpose.msra.mxu0 0.0
    %450 = vmatprep.subr.mxu0 0.0
    %451 = vmatpush1.xpose.msra.mxu0 0.0
    %452 = vmatprep.subr.mxu0 0.0
    %453 = vmatpush1.xpose.msra.mxu0 0.0
    %454 = vmatprep.subr.mxu0 0.0
    %455 = vmatpush1.xpose.msra.mxu0 0.0
    %456 = vmatprep.subr.mxu0 0.0
    %457 = vmatpush1.xpose.msra.mxu0 0.0
    %458 = vmatprep.subr.mxu0 0.0
    %459 = vmatpush1.xpose.msra.mxu0 0.0
    %460 = vmatprep.subr.mxu0 0.0
    %461 = vmatpush1.xpose.msra.mxu0 0.0
    %462 = vmatprep.subr.mxu0 0.0
    %463 = vmatpush1.xpose.msra.mxu0 0.0
    %464 = vmatprep.subr.mxu0 0.0
    %465 = vmatpush1.xpose.msra.mxu0 0.0
    %466 = vmatprep.subr.mxu0 0.0
    %467 = vmatpush1.xpose.msra.mxu0 0.0
    %468 = vmatprep.subr.mxu0 0.0
    %469 = vmatpush1.xpose.msra.mxu0 0.0
    %470 = vmatprep.subr.mxu0 0.0
    %471 = vmatpush1.xpose.msra.mxu0 0.0
    %472 = vmatprep.subr.mxu0 0.0
    %473 = vmatpush1.xpose.msra.mxu0 0.0
    %474 = vmatprep.subr.mxu0 0.0
    %475 = vmatpush1.xpose.msra.mxu0 0.0
    %476 = vmatprep.subr.mxu0 0.0
    %477 = vmatpush1.xpose.msra.mxu0 0.0
    %478 = vmatprep.subr.mxu0 0.0
    %479 = vmatpush1.xpose.msra.mxu0 0.0
    %480 = vmatprep.subr.mxu0 0.0
    %481 = vmatpush1.xpose.msra.mxu0 0.0
    %482 = vmatprep.subr.mxu0 0.0
    %483 = vmatpush1.xpose.msra.mxu0 0.0
    %484 = vmatprep.subr.mxu0 0.0
    %485 = vmatpush1.xpose.msra.mxu0 0.0
    %486 = vmatprep.subr.mxu0 0.0
    %487 = vmatpush1.xpose.msra.mxu0 0.0
    %488 = vmatprep.subr.mxu0 0.0
    %489 = vmatpush1.xpose.msra.mxu0 0.0
    %490 = vmatprep.subr.mxu0 0.0
    %491 = vmatpush1.xpose.msra.mxu0 0.0
    %492 = vmatprep.subr.mxu0 0.0
    %493 = vmatpush1.xpose.msra.mxu0 0.0
    %494 = vmatprep.mubr.f32.mxu0 0.0
    %v495 = vand.u32 %v50, 4294901760
    %496 = vmatmul.mubr.f32.gmra.mrb[0].mxu0 %v495
    %v497 = vpop.f32.mrb[0].mxu0
    %v498 = vadd.f32 %v426, %v497
    %v499 = vpop.f32.mrb[0].mxu0
    %500 = vdwg.mxu0
    %v501 = vmax.f32 %v498, 0.0
    %v504 = vlaneseq
    %v505 = vshrl.u32 %v504, 7
    %v506 = vsub.s32 %v38, %v505
    %v507 = vrot.slane %v27, %v506
    %v508 = vlaneseq
    %v509 = vshrl.u32 %v508, 7
    %v510 = vsub.s32 %v38, %v509
    %v511 = vrot.slane %v30, %v510
    %v512 = vsel %vm47, %v511, %v507
    %v513 = vsel %vm49, %v512, 0
    %515 = vmatprep.subr.mxu0 0.0
    %v516 = vand.u32 %v53, 4294901760
    %517 = vmatpush1.xpose.msra.mxu0 %v516
    %518 = vmatprep.subr.mxu0 0.0
    %519 = vmatpush1.xpose.msra.mxu0 0.0
    %520 = vmatprep.subr.mxu0 0.0
    %521 = vmatpush1.xpose.msra.mxu0 0.0
    %522 = vmatprep.subr.mxu0 0.0
    %523 = vmatpush1.xpose.msra.mxu0 0.0
    %524 = vmatprep.subr.mxu0 0.0
    %525 = vmatpush1.xpose.msra.mxu0 0.0
    %526 = vmatprep.subr.mxu0 0.0
    %527 = vmatpush1.xpose.msra.mxu0 0.0
    %528 = vmatprep.subr.mxu0 0.0
    %529 = vmatpush1.xpose.msra.mxu0 0.0
    %530 = vmatprep.subr.mxu0 0.0
    %531 = vmatpush1.xpose.msra.mxu0 0.0
    %532 = vmatprep.subr.mxu0 0.0
    %533 = vmatpush1.xpose.msra.mxu0 0.0
    %534 = vmatprep.subr.mxu0 0.0
    %535 = vmatpush1.xpose.msra.mxu0 0.0
    %536 = vmatprep.subr.mxu0 0.0
    %537 = vmatpush1.xpose.msra.mxu0 0.0
    %538 = vmatprep.subr.mxu0 0.0
    %539 = vmatpush1.xpose.msra.mxu0 0.0
    %540 = vmatprep.subr.mxu0 0.0
    %541 = vmatpush1.xpose.msra.mxu0 0.0
    %542 = vmatprep.subr.mxu0 0.0
    %543 = vmatpush1.xpose.msra.mxu0 0.0
    %544 = vmatprep.subr.mxu0 0.0
    %545 = vmatpush1.xpose.msra.mxu0 0.0
    %546 = vmatprep.subr.mxu0 0.0
    %547 = vmatpush1.xpose.msra.mxu0 0.0
    %548 = vmatprep.subr.mxu0 0.0
    %549 = vmatpush1.xpose.msra.mxu0 0.0
    %550 = vmatprep.subr.mxu0 0.0
    %551 = vmatpush1.xpose.msra.mxu0 0.0
    %552 = vmatprep.subr.mxu0 0.0
    %553 = vmatpush1.xpose.msra.mxu0 0.0
    %554 = vmatprep.subr.mxu0 0.0
    %555 = vmatpush1.xpose.msra.mxu0 0.0
    %556 = vmatprep.subr.mxu0 0.0
    %557 = vmatpush1.xpose.msra.mxu0 0.0
    %558 = vmatprep.subr.mxu0 0.0
    %559 = vmatpush1.xpose.msra.mxu0 0.0
    %560 = vmatprep.subr.mxu0 0.0
    %561 = vmatpush1.xpose.msra.mxu0 0.0
    %562 = vmatprep.subr.mxu0 0.0
    %563 = vmatpush1.xpose.msra.mxu0 0.0
    %564 = vmatprep.subr.mxu0 0.0
    %565 = vmatpush1.xpose.msra.mxu0 0.0
    %566 = vmatprep.subr.mxu0 0.0
    %567 = vmatpush1.xpose.msra.mxu0 0.0
    %568 = vmatprep.subr.mxu0 0.0
    %569 = vmatpush1.xpose.msra.mxu0 0.0
    %570 = vmatprep.subr.mxu0 0.0
    %571 = vmatpush1.xpose.msra.mxu0 0.0
    %572 = vmatprep.subr.mxu0 0.0
    %573 = vmatpush1.xpose.msra.mxu0 0.0
    %574 = vmatprep.subr.mxu0 0.0
    %575 = vmatpush1.xpose.msra.mxu0 0.0
    %576 = vmatprep.subr.mxu0 0.0
    %577 = vmatpush1.xpose.msra.mxu0 0.0
    %578 = vmatprep.subr.mxu0 0.0
    %579 = vmatpush1.xpose.msra.mxu0 0.0
    %580 = vmatprep.mubr.f32.mxu0 0.0
    %v581 = vand.u32 %v513, 4294901760
    %v582 = vsub.f32 %v513, %v581
    %v583 = vand.u32 %v582, 4294901760
    %v584 = vsub.f32 %v582, %v583
    %v585 = vand.u32 %v584, 4294901760
    %586 = vmatmul.mubr.f32.gmra.mrb[0].mxu0 %v585
    %v587 = vpop.f32.mrb[0].mxu0
    %v588 = vadd.f32 0.0, %v587
    %v589 = vpop.f32.mrb[0].mxu0
    %590 = vdwg.mxu0
    %591 = vmatprep.subr.mxu0 0.0
    %v592 = vand.u32 %v53, 4294901760
    %v593 = vsub.f32 %v53, %v592
    %v594 = vand.u32 %v593, 4294901760
    %v595 = vsub.f32 %v593, %v594
    %v596 = vand.u32 %v595, 4294901760
    %597 = vmatpush1.xpose.msra.mxu0 %v596
    %598 = vmatprep.subr.mxu0 0.0
    %599 = vmatpush1.xpose.msra.mxu0 0.0
    %600 = vmatprep.subr.mxu0 0.0
    %601 = vmatpush1.xpose.msra.mxu0 0.0
    %602 = vmatprep.subr.mxu0 0.0
    %603 = vmatpush1.xpose.msra.mxu0 0.0
    %604 = vmatprep.subr.mxu0 0.0
    %605 = vmatpush1.xpose.msra.mxu0 0.0
    %606 = vmatprep.subr.mxu0 0.0
    %607 = vmatpush1.xpose.msra.mxu0 0.0
    %608 = vmatprep.subr.mxu0 0.0
    %609 = vmatpush1.xpose.msra.mxu0 0.0
    %610 = vmatprep.subr.mxu0 0.0
    %611 = vmatpush1.xpose.msra.mxu0 0.0
    %612 = vmatprep.subr.mxu0 0.0
    %613 = vmatpush1.xpose.msra.mxu0 0.0
    %614 = vmatprep.subr.mxu0 0.0
    %615 = vmatpush1.xpose.msra.mxu0 0.0
    %616 = vmatprep.subr.mxu0 0.0
    %617 = vmatpush1.xpose.msra.mxu0 0.0
    %618 = vmatprep.subr.mxu0 0.0
    %619 = vmatpush1.xpose.msra.mxu0 0.0
    %620 = vmatprep.subr.mxu0 0.0
    %621 = vmatpush1.xpose.msra.mxu0 0.0
    %622 = vmatprep.subr.mxu0 0.0
    %623 = vmatpush1.xpose.msra.mxu0 0.0
    %624 = vmatprep.subr.mxu0 0.0
    %625 = vmatpush1.xpose.msra.mxu0 0.0
    %626 = vmatprep.subr.mxu0 0.0
    %627 = vmatpush1.xpose.msra.mxu0 0.0
    %628 = vmatprep.subr.mxu0 0.0
    %629 = vmatpush1.xpose.msra.mxu0 0.0
    %630 = vmatprep.subr.mxu0 0.0
    %631 = vmatpush1.xpose.msra.mxu0 0.0
    %632 = vmatprep.subr.mxu0 0.0
    %633 = vmatpush1.xpose.msra.mxu0 0.0
    %634 = vmatprep.subr.mxu0 0.0
    %635 = vmatpush1.xpose.msra.mxu0 0.0
    %636 = vmatprep.subr.mxu0 0.0
    %637 = vmatpush1.xpose.msra.mxu0 0.0
    %638 = vmatprep.subr.mxu0 0.0
    %639 = vmatpush1.xpose.msra.mxu0 0.0
    %640 = vmatprep.subr.mxu0 0.0
    %641 = vmatpush1.xpose.msra.mxu0 0.0
    %642 = vmatprep.subr.mxu0 0.0
    %643 = vmatpush1.xpose.msra.mxu0 0.0
    %644 = vmatprep.subr.mxu0 0.0
    %645 = vmatpush1.xpose.msra.mxu0 0.0
    %646 = vmatprep.subr.mxu0 0.0
    %647 = vmatpush1.xpose.msra.mxu0 0.0
    %648 = vmatprep.subr.mxu0 0.0
    %649 = vmatpush1.xpose.msra.mxu0 0.0
    %650 = vmatprep.subr.mxu0 0.0
    %651 = vmatpush1.xpose.msra.mxu0 0.0
    %652 = vmatprep.subr.mxu0 0.0
    %653 = vmatpush1.xpose.msra.mxu0 0.0
    %654 = vmatprep.subr.mxu0 0.0
    %655 = vmatpush1.xpose.msra.mxu0 0.0
    %656 = vmatprep.subr.mxu0 0.0
    %657 = vmatpush1.xpose.msra.mxu0 0.0
    %658 = vmatprep.subr.mxu0 0.0
    %659 = vmatpush1.xpose.msra.mxu0 0.0
    %660 = vmatprep.mubr.f32.mxu0 0.0
    %v661 = vand.u32 %v513, 4294901760
    %662 = vmatmul.mubr.f32.gmra.mrb[0].mxu0 %v661
    %v663 = vpop.f32.mrb[0].mxu0
    %v664 = vadd.f32 %v588, %v663
    %v665 = vpop.f32.mrb[0].mxu0
    %666 = vdwg.mxu0
    %667 = vmatprep.subr.mxu0 0.0
    %v668 = vand.u32 %v53, 4294901760
    %v669 = vsub.f32 %v53, %v668
    %670 = vmatpush1.xpose.msra.mxu0 %v669
    %671 = vmatprep.subr.mxu0 0.0
    %672 = vmatpush1.xpose.msra.mxu0 0.0
    %673 = vmatprep.subr.mxu0 0.0
    %674 = vmatpush1.xpose.msra.mxu0 0.0
    %675 = vmatprep.subr.mxu0 0.0
    %676 = vmatpush1.xpose.msra.mxu0 0.0
    %677 = vmatprep.subr.mxu0 0.0
    %678 = vmatpush1.xpose.msra.mxu0 0.0
    %679 = vmatprep.subr.mxu0 0.0
    %680 = vmatpush1.xpose.msra.mxu0 0.0
    %681 = vmatprep.subr.mxu0 0.0
    %682 = vmatpush1.xpose.msra.mxu0 0.0
    %683 = vmatprep.subr.mxu0 0.0
    %684 = vmatpush1.xpose.msra.mxu0 0.0
    %685 = vmatprep.subr.mxu0 0.0
    %686 = vmatpush1.xpose.msra.mxu0 0.0
    %687 = vmatprep.subr.mxu0 0.0
    %688 = vmatpush1.xpose.msra.mxu0 0.0
    %689 = vmatprep.subr.mxu0 0.0
    %690 = vmatpush1.xpose.msra.mxu0 0.0
    %691 = vmatprep.subr.mxu0 0.0
    %692 = vmatpush1.xpose.msra.mxu0 0.0
    %693 = vmatprep.subr.mxu0 0.0
    %694 = vmatpush1.xpose.msra.mxu0 0.0
    %695 = vmatprep.subr.mxu0 0.0
    %696 = vmatpush1.xpose.msra.mxu0 0.0
    %697 = vmatprep.subr.mxu0 0.0
    %698 = vmatpush1.xpose.msra.mxu0 0.0
    %699 = vmatprep.subr.mxu0 0.0
    %700 = vmatpush1.xpose.msra.mxu0 0.0
    %701 = vmatprep.subr.mxu0 0.0
    %702 = vmatpush1.xpose.msra.mxu0 0.0
    %703 = vmatprep.subr.mxu0 0.0
    %704 = vmatpush1.xpose.msra.mxu0 0.0
    %705 = vmatprep.subr.mxu0 0.0
    %706 = vmatpush1.xpose.msra.mxu0 0.0
    %707 = vmatprep.subr.mxu0 0.0
    %708 = vmatpush1.xpose.msra.mxu0 0.0
    %709 = vmatprep.subr.mxu0 0.0
    %710 = vmatpush1.xpose.msra.mxu0 0.0
    %711 = vmatprep.subr.mxu0 0.0
    %712 = vmatpush1.xpose.msra.mxu0 0.0
    %713 = vmatprep.subr.mxu0 0.0
    %714 = vmatpush1.xpose.msra.mxu0 0.0
    %715 = vmatprep.subr.mxu0 0.0
    %716 = vmatpush1.xpose.msra.mxu0 0.0
    %717 = vmatprep.subr.mxu0 0.0
    %718 = vmatpush1.xpose.msra.mxu0 0.0
    %719 = vmatprep.subr.mxu0 0.0
    %720 = vmatpush1.xpose.msra.mxu0 0.0
    %721 = vmatprep.subr.mxu0 0.0
    %722 = vmatpush1.xpose.msra.mxu0 0.0
    %723 = vmatprep.subr.mxu0 0.0
    %724 = vmatpush1.xpose.msra.mxu0 0.0
    %725 = vmatprep.subr.mxu0 0.0
    %726 = vmatpush1.xpose.msra.mxu0 0.0
    %727 = vmatprep.subr.mxu0 0.0
    %728 = vmatpush1.xpose.msra.mxu0 0.0
    %729 = vmatprep.subr.mxu0 0.0
    %730 = vmatpush1.xpose.msra.mxu0 0.0
    %731 = vmatprep.subr.mxu0 0.0
    %732 = vmatpush1.xpose.msra.mxu0 0.0
    %733 = vmatprep.mubr.f32.mxu0 0.0
    %v734 = vand.u32 %v513, 4294901760
    %v735 = vsub.f32 %v513, %v734
    %736 = vmatmul.mubr.f32.gmra.mrb[0].mxu0 %v735
    %v737 = vpop.f32.mrb[0].mxu0
    %v738 = vadd.f32 %v664, %v737
    %v739 = vpop.f32.mrb[0].mxu0
    %740 = vdwg.mxu0
    %741 = vmatprep.subr.mxu0 0.0
    %v742 = vand.u32 %v53, 4294901760
    %743 = vmatpush1.xpose.msra.mxu0 %v742
    %744 = vmatprep.subr.mxu0 0.0
    %745 = vmatpush1.xpose.msra.mxu0 0.0
    %746 = vmatprep.subr.mxu0 0.0
    %747 = vmatpush1.xpose.msra.mxu0 0.0
    %748 = vmatprep.subr.mxu0 0.0
    %749 = vmatpush1.xpose.msra.mxu0 0.0
    %750 = vmatprep.subr.mxu0 0.0
    %751 = vmatpush1.xpose.msra.mxu0 0.0
    %752 = vmatprep.subr.mxu0 0.0
    %753 = vmatpush1.xpose.msra.mxu0 0.0
    %754 = vmatprep.subr.mxu0 0.0
    %755 = vmatpush1.xpose.msra.mxu0 0.0
    %756 = vmatprep.subr.mxu0 0.0
    %757 = vmatpush1.xpose.msra.mxu0 0.0
    %758 = vmatprep.subr.mxu0 0.0
    %759 = vmatpush1.xpose.msra.mxu0 0.0
    %760 = vmatprep.subr.mxu0 0.0
    %761 = vmatpush1.xpose.msra.mxu0 0.0
    %762 = vmatprep.subr.mxu0 0.0
    %763 = vmatpush1.xpose.msra.mxu0 0.0
    %764 = vmatprep.subr.mxu0 0.0
    %765 = vmatpush1.xpose.msra.mxu0 0.0
    %766 = vmatprep.subr.mxu0 0.0
    %767 = vmatpush1.xpose.msra.mxu0 0.0
    %768 = vmatprep.subr.mxu0 0.0
    %769 = vmatpush1.xpose.msra.mxu0 0.0
    %770 = vmatprep.subr.mxu0 0.0
    %771 = vmatpush1.xpose.msra.mxu0 0.0
    %772 = vmatprep.subr.mxu0 0.0
    %773 = vmatpush1.xpose.msra.mxu0 0.0
    %774 = vmatprep.subr.mxu0 0.0
    %775 = vmatpush1.xpose.msra.mxu0 0.0
    %776 = vmatprep.subr.mxu0 0.0
    %777 = vmatpush1.xpose.msra.mxu0 0.0
    %778 = vmatprep.subr.mxu0 0.0
    %779 = vmatpush1.xpose.msra.mxu0 0.0
    %780 = vmatprep.subr.mxu0 0.0
    %781 = vmatpush1.xpose.msra.mxu0 0.0
    %782 = vmatprep.subr.mxu0 0.0
    %783 = vmatpush1.xpose.msra.mxu0 0.0
    %784 = vmatprep.subr.mxu0 0.0
    %785 = vmatpush1.xpose.msra.mxu0 0.0
    %786 = vmatprep.subr.mxu0 0.0
    %787 = vmatpush1.xpose.msra.mxu0 0.0
    %788 = vmatprep.subr.mxu0 0.0
    %789 = vmatpush1.xpose.msra.mxu0 0.0
    %790 = vmatprep.subr.mxu0 0.0
    %791 = vmatpush1.xpose.msra.mxu0 0.0
    %792 = vmatprep.subr.mxu0 0.0
    %793 = vmatpush1.xpose.msra.mxu0 0.0
    %794 = vmatprep.subr.mxu0 0.0
    %795 = vmatpush1.xpose.msra.mxu0 0.0
    %796 = vmatprep.subr.mxu0 0.0
    %797 = vmatpush1.xpose.msra.mxu0 0.0
    %798 = vmatprep.subr.mxu0 0.0
    %799 = vmatpush1.xpose.msra.mxu0 0.0
    %800 = vmatprep.subr.mxu0 0.0
    %801 = vmatpush1.xpose.msra.mxu0 0.0
    %802 = vmatprep.subr.mxu0 0.0
    %803 = vmatpush1.xpose.msra.mxu0 0.0
    %804 = vmatprep.subr.mxu0 0.0
    %805 = vmatpush1.xpose.msra.mxu0 0.0
    %806 = vmatprep.mubr.f32.mxu0 0.0
    %v807 = vand.u32 %v513, 4294901760
    %v808 = vsub.f32 %v513, %v807
    %v809 = vand.u32 %v808, 4294901760
    %810 = vmatmul.mubr.f32.gmra.mrb[0].mxu0 %v809
    %v811 = vpop.f32.mrb[0].mxu0
    %v812 = vadd.f32 %v738, %v811
    %v813 = vpop.f32.mrb[0].mxu0
    %814 = vdwg.mxu0
    %815 = vmatprep.subr.mxu0 0.0
    %v816 = vand.u32 %v53, 4294901760
    %v817 = vsub.f32 %v53, %v816
    %v818 = vand.u32 %v817, 4294901760
    %819 = vmatpush1.xpose.msra.mxu0 %v818
    %820 = vmatprep.subr.mxu0 0.0
    %821 = vmatpush1.xpose.msra.mxu0 0.0
    %822 = vmatprep.subr.mxu0 0.0
    %823 = vmatpush1.xpose.msra.mxu0 0.0
    %824 = vmatprep.subr.mxu0 0.0
    %825 = vmatpush1.xpose.msra.mxu0 0.0
    %826 = vmatprep.subr.mxu0 0.0
    %827 = vmatpush1.xpose.msra.mxu0 0.0
    %828 = vmatprep.subr.mxu0 0.0
    %829 = vmatpush1.xpose.msra.mxu0 0.0
    %830 = vmatprep.subr.mxu0 0.0
    %831 = vmatpush1.xpose.msra.mxu0 0.0
    %832 = vmatprep.subr.mxu0 0.0
    %833 = vmatpush1.xpose.msra.mxu0 0.0
    %834 = vmatprep.subr.mxu0 0.0
    %835 = vmatpush1.xpose.msra.mxu0 0.0
    %836 = vmatprep.subr.mxu0 0.0
    %837 = vmatpush1.xpose.msra.mxu0 0.0
    %838 = vmatprep.subr.mxu0 0.0
    %839 = vmatpush1.xpose.msra.mxu0 0.0
    %840 = vmatprep.subr.mxu0 0.0
    %841 = vmatpush1.xpose.msra.mxu0 0.0
    %842 = vmatprep.subr.mxu0 0.0
    %843 = vmatpush1.xpose.msra.mxu0 0.0
    %844 = vmatprep.subr.mxu0 0.0
    %845 = vmatpush1.xpose.msra.mxu0 0.0
    %846 = vmatprep.subr.mxu0 0.0
    %847 = vmatpush1.xpose.msra.mxu0 0.0
    %848 = vmatprep.subr.mxu0 0.0
    %849 = vmatpush1.xpose.msra.mxu0 0.0
    %850 = vmatprep.subr.mxu0 0.0
    %851 = vmatpush1.xpose.msra.mxu0 0.0
    %852 = vmatprep.subr.mxu0 0.0
    %853 = vmatpush1.xpose.msra.mxu0 0.0
    %854 = vmatprep.subr.mxu0 0.0
    %855 = vmatpush1.xpose.msra.mxu0 0.0
    %856 = vmatprep.subr.mxu0 0.0
    %857 = vmatpush1.xpose.msra.mxu0 0.0
    %858 = vmatprep.subr.mxu0 0.0
    %859 = vmatpush1.xpose.msra.mxu0 0.0
    %860 = vmatprep.subr.mxu0 0.0
    %861 = vmatpush1.xpose.msra.mxu0 0.0
    %862 = vmatprep.subr.mxu0 0.0
    %863 = vmatpush1.xpose.msra.mxu0 0.0
    %864 = vmatprep.subr.mxu0 0.0
    %865 = vmatpush1.xpose.msra.mxu0 0.0
    %866 = vmatprep.subr.mxu0 0.0
    %867 = vmatpush1.xpose.msra.mxu0 0.0
    %868 = vmatprep.subr.mxu0 0.0
    %869 = vmatpush1.xpose.msra.mxu0 0.0
    %870 = vmatprep.subr.mxu0 0.0
    %871 = vmatpush1.xpose.msra.mxu0 0.0
    %872 = vmatprep.subr.mxu0 0.0
    %873 = vmatpush1.xpose.msra.mxu0 0.0
    %874 = vmatprep.subr.mxu0 0.0
    %875 = vmatpush1.xpose.msra.mxu0 0.0
    %876 = vmatprep.subr.mxu0 0.0
    %877 = vmatpush1.xpose.msra.mxu0 0.0
    %878 = vmatprep.subr.mxu0 0.0
    %879 = vmatpush1.xpose.msra.mxu0 0.0
    %880 = vmatprep.subr.mxu0 0.0
    %881 = vmatpush1.xpose.msra.mxu0 0.0
    %882 = vmatprep.mubr.f32.mxu0 0.0
    %v883 = vand.u32 %v513, 4294901760
    %884 = vmatmul.mubr.f32.gmra.mrb[0].mxu0 %v883
    %v885 = vpop.f32.mrb[0].mxu0
    %v886 = vadd.f32 %v812, %v885
    %v887 = vpop.f32.mrb[0].mxu0
    %888 = vdwg.mxu0
    %889 = vmatprep.subr.mxu0 0.0
    %v890 = vand.u32 %v53, 4294901760
    %891 = vmatpush1.xpose.msra.mxu0 %v890
    %892 = vmatprep.subr.mxu0 0.0
    %893 = vmatpush1.xpose.msra.mxu0 0.0
    %894 = vmatprep.subr.mxu0 0.0
    %895 = vmatpush1.xpose.msra.mxu0 0.0
    %896 = vmatprep.subr.mxu0 0.0
    %897 = vmatpush1.xpose.msra.mxu0 0.0
    %898 = vmatprep.subr.mxu0 0.0
    %899 = vmatpush1.xpose.msra.mxu0 0.0
    %900 = vmatprep.subr.mxu0 0.0
    %901 = vmatpush1.xpose.msra.mxu0 0.0
    %902 = vmatprep.subr.mxu0 0.0
    %903 = vmatpush1.xpose.msra.mxu0 0.0
    %904 = vmatprep.subr.mxu0 0.0
    %905 = vmatpush1.xpose.msra.mxu0 0.0
    %906 = vmatprep.subr.mxu0 0.0
    %907 = vmatpush1.xpose.msra.mxu0 0.0
    %908 = vmatprep.subr.mxu0 0.0
    %909 = vmatpush1.xpose.msra.mxu0 0.0
    %910 = vmatprep.subr.mxu0 0.0
    %911 = vmatpush1.xpose.msra.mxu0 0.0
    %912 = vmatprep.subr.mxu0 0.0
    %913 = vmatpush1.xpose.msra.mxu0 0.0
    %914 = vmatprep.subr.mxu0 0.0
    %915 = vmatpush1.xpose.msra.mxu0 0.0
    %916 = vmatprep.subr.mxu0 0.0
    %917 = vmatpush1.xpose.msra.mxu0 0.0
    %918 = vmatprep.subr.mxu0 0.0
    %919 = vmatpush1.xpose.msra.mxu0 0.0
    %920 = vmatprep.subr.mxu0 0.0
    %921 = vmatpush1.xpose.msra.mxu0 0.0
    %922 = vmatprep.subr.mxu0 0.0
    %923 = vmatpush1.xpose.msra.mxu0 0.0
    %924 = vmatprep.subr.mxu0 0.0
    %925 = vmatpush1.xpose.msra.mxu0 0.0
    %926 = vmatprep.subr.mxu0 0.0
    %927 = vmatpush1.xpose.msra.mxu0 0.0
    %928 = vmatprep.subr.mxu0 0.0
    %929 = vmatpush1.xpose.msra.mxu0 0.0
    %930 = vmatprep.subr.mxu0 0.0
    %931 = vmatpush1.xpose.msra.mxu0 0.0
    %932 = vmatprep.subr.mxu0 0.0
    %933 = vmatpush1.xpose.msra.mxu0 0.0
    %934 = vmatprep.subr.mxu0 0.0
    %935 = vmatpush1.xpose.msra.mxu0 0.0
    %936 = vmatprep.subr.mxu0 0.0
    %937 = vmatpush1.xpose.msra.mxu0 0.0
    %938 = vmatprep.subr.mxu0 0.0
    %939 = vmatpush1.xpose.msra.mxu0 0.0
    %940 = vmatprep.subr.mxu0 0.0
    %941 = vmatpush1.xpose.msra.mxu0 0.0
    %942 = vmatprep.subr.mxu0 0.0
    %943 = vmatpush1.xpose.msra.mxu0 0.0
    %944 = vmatprep.subr.mxu0 0.0
    %945 = vmatpush1.xpose.msra.mxu0 0.0
    %946 = vmatprep.subr.mxu0 0.0
    %947 = vmatpush1.xpose.msra.mxu0 0.0
    %948 = vmatprep.subr.mxu0 0.0
    %949 = vmatpush1.xpose.msra.mxu0 0.0
    %950 = vmatprep.subr.mxu0 0.0
    %951 = vmatpush1.xpose.msra.mxu0 0.0
    %952 = vmatprep.subr.mxu0 0.0
    %953 = vmatpush1.xpose.msra.mxu0 0.0
    %954 = vmatprep.mubr.f32.mxu0 0.0
    %v955 = vand.u32 %v513, 4294901760
    %956 = vmatmul.mubr.f32.gmra.mrb[0].mxu0 %v955
    %v957 = vpop.f32.mrb[0].mxu0
    %v958 = vadd.f32 %v886, %v957
    %v959 = vpop.f32.mrb[0].mxu0
    %960 = vdwg.mxu0
    %v961 = vmax.f32 %v958, 0.0
    %v962 = vadd.f32 %v501, %v961
    %v964 = vsel %vm49, %v962, 0
    %v967 = vsel %vm49, %v34, 0
    %969 = vmatprep.subr.mxu0 0.0
    %v970 = vand.u32 %v967, 4294901760
    %971 = vmatpush1.xpose.msra.mxu0 %v970
    %972 = vmatprep.subr.mxu0 0.0
    %973 = vmatpush1.xpose.msra.mxu0 0.0
    %974 = vmatprep.subr.mxu0 0.0
    %975 = vmatpush1.xpose.msra.mxu0 0.0
    %976 = vmatprep.subr.mxu0 0.0
    %977 = vmatpush1.xpose.msra.mxu0 0.0
    %978 = vmatprep.subr.mxu0 0.0
    %979 = vmatpush1.xpose.msra.mxu0 0.0
    %980 = vmatprep.subr.mxu0 0.0
    %981 = vmatpush1.xpose.msra.mxu0 0.0
    %982 = vmatprep.subr.mxu0 0.0
    %983 = vmatpush1.xpose.msra.mxu0 0.0
    %984 = vmatprep.subr.mxu0 0.0
    %985 = vmatpush1.xpose.msra.mxu0 0.0
    %986 = vmatprep.subr.mxu0 0.0
    %987 = vmatpush1.xpose.msra.mxu0 0.0
    %988 = vmatprep.subr.mxu0 0.0
    %989 = vmatpush1.xpose.msra.mxu0 0.0
    %990 = vmatprep.subr.mxu0 0.0
    %991 = vmatpush1.xpose.msra.mxu0 0.0
    %992 = vmatprep.subr.mxu0 0.0
    %993 = vmatpush1.xpose.msra.mxu0 0.0
    %994 = vmatprep.subr.mxu0 0.0
    %995 = vmatpush1.xpose.msra.mxu0 0.0
    %996 = vmatprep.subr.mxu0 0.0
    %997 = vmatpush1.xpose.msra.mxu0 0.0
    %998 = vmatprep.subr.mxu0 0.0
    %999 = vmatpush1.xpose.msra.mxu0 0.0
    %1000 = vmatprep.subr.mxu0 0.0
    %1001 = vmatpush1.xpose.msra.mxu0 0.0
    %1002 = vmatprep.subr.mxu0 0.0
    %1003 = vmatpush1.xpose.msra.mxu0 0.0
    %1004 = vmatprep.subr.mxu0 0.0
    %1005 = vmatpush1.xpose.msra.mxu0 0.0
    %1006 = vmatprep.subr.mxu0 0.0
    %1007 = vmatpush1.xpose.msra.mxu0 0.0
    %1008 = vmatprep.subr.mxu0 0.0
    %1009 = vmatpush1.xpose.msra.mxu0 0.0
    %1010 = vmatprep.subr.mxu0 0.0
    %1011 = vmatpush1.xpose.msra.mxu0 0.0
    %1012 = vmatprep.subr.mxu0 0.0
    %1013 = vmatpush1.xpose.msra.mxu0 0.0
    %1014 = vmatprep.subr.mxu0 0.0
    %1015 = vmatpush1.xpose.msra.mxu0 0.0
    %1016 = vmatprep.subr.mxu0 0.0
    %1017 = vmatpush1.xpose.msra.mxu0 0.0
    %1018 = vmatprep.subr.mxu0 0.0
    %1019 = vmatpush1.xpose.msra.mxu0 0.0
    %1020 = vmatprep.subr.mxu0 0.0
    %1021 = vmatpush1.xpose.msra.mxu0 0.0
    %1022 = vmatprep.subr.mxu0 0.0
    %1023 = vmatpush1.xpose.msra.mxu0 0.0
    %1024 = vmatprep.subr.mxu0 0.0
    %1025 = vmatpush1.xpose.msra.mxu0 0.0
    %1026 = vmatprep.subr.mxu0 0.0
    %1027 = vmatpush1.xpose.msra.mxu0 0.0
    %1028 = vmatprep.subr.mxu0 0.0
    %1029 = vmatpush1.xpose.msra.mxu0 0.0
    %1030 = vmatprep.subr.mxu0 0.0
    %1031 = vmatpush1.xpose.msra.mxu0 0.0
    %1032 = vmatprep.subr.mxu0 0.0
    %1033 = vmatpush1.xpose.msra.mxu0 0.0
    %1034 = vmatprep.mubr.f32.mxu0 0.0
    %v1035 = vand.u32 %v964, 4294901760
    %v1036 = vsub.f32 %v964, %v1035
    %v1037 = vand.u32 %v1036, 4294901760
    %v1038 = vsub.f32 %v1036, %v1037
    %v1039 = vand.u32 %v1038, 4294901760
    %1040 = vmatmul.mubr.f32.gmra.mrb[0].mxu0 %v1039
    %v1041 = vpop.f32.mrb[0].mxu0
    %v1042 = vadd.f32 0.0, %v1041
    %v1043 = vpop.f32.mrb[0].mxu0
    %1044 = vdwg.mxu0
    %1045 = vmatprep.subr.mxu0 0.0
    %v1046 = vand.u32 %v967, 4294901760
    %v1047 = vsub.f32 %v967, %v1046
    %v1048 = vand.u32 %v1047, 4294901760
    %v1049 = vsub.f32 %v1047, %v1048
    %v1050 = vand.u32 %v1049, 4294901760
    %1051 = vmatpush1.xpose.msra.mxu0 %v1050
    %1052 = vmatprep.subr.mxu0 0.0
    %1053 = vmatpush1.xpose.msra.mxu0 0.0
    %1054 = vmatprep.subr.mxu0 0.0
    %1055 = vmatpush1.xpose.msra.mxu0 0.0
    %1056 = vmatprep.subr.mxu0 0.0
    %1057 = vmatpush1.xpose.msra.mxu0 0.0
    %1058 = vmatprep.subr.mxu0 0.0
    %1059 = vmatpush1.xpose.msra.mxu0 0.0
    %1060 = vmatprep.subr.mxu0 0.0
    %1061 = vmatpush1.xpose.msra.mxu0 0.0
    %1062 = vmatprep.subr.mxu0 0.0
    %1063 = vmatpush1.xpose.msra.mxu0 0.0
    %1064 = vmatprep.subr.mxu0 0.0
    %1065 = vmatpush1.xpose.msra.mxu0 0.0
    %1066 = vmatprep.subr.mxu0 0.0
    %1067 = vmatpush1.xpose.msra.mxu0 0.0
    %1068 = vmatprep.subr.mxu0 0.0
    %1069 = vmatpush1.xpose.msra.mxu0 0.0
    %1070 = vmatprep.subr.mxu0 0.0
    %1071 = vmatpush1.xpose.msra.mxu0 0.0
    %1072 = vmatprep.subr.mxu0 0.0
    %1073 = vmatpush1.xpose.msra.mxu0 0.0
    %1074 = vmatprep.subr.mxu0 0.0
    %1075 = vmatpush1.xpose.msra.mxu0 0.0
    %1076 = vmatprep.subr.mxu0 0.0
    %1077 = vmatpush1.xpose.msra.mxu0 0.0
    %1078 = vmatprep.subr.mxu0 0.0
    %1079 = vmatpush1.xpose.msra.mxu0 0.0
    %1080 = vmatprep.subr.mxu0 0.0
    %1081 = vmatpush1.xpose.msra.mxu0 0.0
    %1082 = vmatprep.subr.mxu0 0.0
    %1083 = vmatpush1.xpose.msra.mxu0 0.0
    %1084 = vmatprep.subr.mxu0 0.0
    %1085 = vmatpush1.xpose.msra.mxu0 0.0
    %1086 = vmatprep.subr.mxu0 0.0
    %1087 = vmatpush1.xpose.msra.mxu0 0.0
    %1088 = vmatprep.subr.mxu0 0.0
    %1089 = vmatpush1.xpose.msra.mxu0 0.0
    %1090 = vmatprep.subr.mxu0 0.0
    %1091 = vmatpush1.xpose.msra.mxu0 0.0
    %1092 = vmatprep.subr.mxu0 0.0
    %1093 = vmatpush1.xpose.msra.mxu0 0.0
    %1094 = vmatprep.subr.mxu0 0.0
    %1095 = vmatpush1.xpose.msra.mxu0 0.0
    %1096 = vmatprep.subr.mxu0 0.0
    %1097 = vmatpush1.xpose.msra.mxu0 0.0
    %1098 = vmatprep.subr.mxu0 0.0
    %1099 = vmatpush1.xpose.msra.mxu0 0.0
    %1100 = vmatprep.subr.mxu0 0.0
    %1101 = vmatpush1.xpose.msra.mxu0 0.0
    %1102 = vmatprep.subr.mxu0 0.0
    %1103 = vmatpush1.xpose.msra.mxu0 0.0
    %1104 = vmatprep.subr.mxu0 0.0
    %1105 = vmatpush1.xpose.msra.mxu0 0.0
    %1106 = vmatprep.subr.mxu0 0.0
    %1107 = vmatpush1.xpose.msra.mxu0 0.0
    %1108 = vmatprep.subr.mxu0 0.0
    %1109 = vmatpush1.xpose.msra.mxu0 0.0
    %1110 = vmatprep.subr.mxu0 0.0
    %1111 = vmatpush1.xpose.msra.mxu0 0.0
    %1112 = vmatprep.subr.mxu0 0.0
    %1113 = vmatpush1.xpose.msra.mxu0 0.0
    %1114 = vmatprep.mubr.f32.mxu0 0.0
    %v1115 = vand.u32 %v964, 4294901760
    %1116 = vmatmul.mubr.f32.gmra.mrb[0].mxu0 %v1115
    %v1117 = vpop.f32.mrb[0].mxu0
    %v1118 = vadd.f32 %v1042, %v1117
    %v1119 = vpop.f32.mrb[0].mxu0
    %1120 = vdwg.mxu0
    %1121 = vmatprep.subr.mxu0 0.0
    %v1122 = vand.u32 %v967, 4294901760
    %v1123 = vsub.f32 %v967, %v1122
    %1124 = vmatpush1.xpose.msra.mxu0 %v1123
    %1125 = vmatprep.subr.mxu0 0.0
    %1126 = vmatpush1.xpose.msra.mxu0 0.0
    %1127 = vmatprep.subr.mxu0 0.0
    %1128 = vmatpush1.xpose.msra.mxu0 0.0
    %1129 = vmatprep.subr.mxu0 0.0
    %1130 = vmatpush1.xpose.msra.mxu0 0.0
    %1131 = vmatprep.subr.mxu0 0.0
    %1132 = vmatpush1.xpose.msra.mxu0 0.0
    %1133 = vmatprep.subr.mxu0 0.0
    %1134 = vmatpush1.xpose.msra.mxu0 0.0
    %1135 = vmatprep.subr.mxu0 0.0
    %1136 = vmatpush1.xpose.msra.mxu0 0.0
    %1137 = vmatprep.subr.mxu0 0.0
    %1138 = vmatpush1.xpose.msra.mxu0 0.0
    %1139 = vmatprep.subr.mxu0 0.0
    %1140 = vmatpush1.xpose.msra.mxu0 0.0
    %1141 = vmatprep.subr.mxu0 0.0
    %1142 = vmatpush1.xpose.msra.mxu0 0.0
    %1143 = vmatprep.subr.mxu0 0.0
    %1144 = vmatpush1.xpose.msra.mxu0 0.0
    %1145 = vmatprep.subr.mxu0 0.0
    %1146 = vmatpush1.xpose.msra.mxu0 0.0
    %1147 = vmatprep.subr.mxu0 0.0
    %1148 = vmatpush1.xpose.msra.mxu0 0.0
    %1149 = vmatprep.subr.mxu0 0.0
    %1150 = vmatpush1.xpose.msra.mxu0 0.0
    %1151 = vmatprep.subr.mxu0 0.0
    %1152 = vmatpush1.xpose.msra.mxu0 0.0
    %1153 = vmatprep.subr.mxu0 0.0
    %1154 = vmatpush1.xpose.msra.mxu0 0.0
    %1155 = vmatprep.subr.mxu0 0.0
    %1156 = vmatpush1.xpose.msra.mxu0 0.0
    %1157 = vmatprep.subr.mxu0 0.0
    %1158 = vmatpush1.xpose.msra.mxu0 0.0
    %1159 = vmatprep.subr.mxu0 0.0
    %1160 = vmatpush1.xpose.msra.mxu0 0.0
    %1161 = vmatprep.subr.mxu0 0.0
    %1162 = vmatpush1.xpose.msra.mxu0 0.0
    %1163 = vmatprep.subr.mxu0 0.0
    %1164 = vmatpush1.xpose.msra.mxu0 0.0
    %1165 = vmatprep.subr.mxu0 0.0
    %1166 = vmatpush1.xpose.msra.mxu0 0.0
    %1167 = vmatprep.subr.mxu0 0.0
    %1168 = vmatpush1.xpose.msra.mxu0 0.0
    %1169 = vmatprep.subr.mxu0 0.0
    %1170 = vmatpush1.xpose.msra.mxu0 0.0
    %1171 = vmatprep.subr.mxu0 0.0
    %1172 = vmatpush1.xpose.msra.mxu0 0.0
    %1173 = vmatprep.subr.mxu0 0.0
    %1174 = vmatpush1.xpose.msra.mxu0 0.0
    %1175 = vmatprep.subr.mxu0 0.0
    %1176 = vmatpush1.xpose.msra.mxu0 0.0
    %1177 = vmatprep.subr.mxu0 0.0
    %1178 = vmatpush1.xpose.msra.mxu0 0.0
    %1179 = vmatprep.subr.mxu0 0.0
    %1180 = vmatpush1.xpose.msra.mxu0 0.0
    %1181 = vmatprep.subr.mxu0 0.0
    %1182 = vmatpush1.xpose.msra.mxu0 0.0
    %1183 = vmatprep.subr.mxu0 0.0
    %1184 = vmatpush1.xpose.msra.mxu0 0.0
    %1185 = vmatprep.subr.mxu0 0.0
    %1186 = vmatpush1.xpose.msra.mxu0 0.0
    %1187 = vmatprep.mubr.f32.mxu0 0.0
    %v1188 = vand.u32 %v964, 4294901760
    %v1189 = vsub.f32 %v964, %v1188
    %1190 = vmatmul.mubr.f32.gmra.mrb[0].mxu0 %v1189
    %v1191 = vpop.f32.mrb[0].mxu0
    %v1192 = vadd.f32 %v1118, %v1191
    %v1193 = vpop.f32.mrb[0].mxu0
    %1194 = vdwg.mxu0
    %1195 = vmatprep.subr.mxu0 0.0
    %v1196 = vand.u32 %v967, 4294901760
    %1197 = vmatpush1.xpose.msra.mxu0 %v1196
    %1198 = vmatprep.subr.mxu0 0.0
    %1199 = vmatpush1.xpose.msra.mxu0 0.0
    %1200 = vmatprep.subr.mxu0 0.0
    %1201 = vmatpush1.xpose.msra.mxu0 0.0
    %1202 = vmatprep.subr.mxu0 0.0
    %1203 = vmatpush1.xpose.msra.mxu0 0.0
    %1204 = vmatprep.subr.mxu0 0.0
    %1205 = vmatpush1.xpose.msra.mxu0 0.0
    %1206 = vmatprep.subr.mxu0 0.0
    %1207 = vmatpush1.xpose.msra.mxu0 0.0
    %1208 = vmatprep.subr.mxu0 0.0
    %1209 = vmatpush1.xpose.msra.mxu0 0.0
    %1210 = vmatprep.subr.mxu0 0.0
    %1211 = vmatpush1.xpose.msra.mxu0 0.0
    %1212 = vmatprep.subr.mxu0 0.0
    %1213 = vmatpush1.xpose.msra.mxu0 0.0
    %1214 = vmatprep.subr.mxu0 0.0
    %1215 = vmatpush1.xpose.msra.mxu0 0.0
    %1216 = vmatprep.subr.mxu0 0.0
    %1217 = vmatpush1.xpose.msra.mxu0 0.0
    %1218 = vmatprep.subr.mxu0 0.0
    %1219 = vmatpush1.xpose.msra.mxu0 0.0
    %1220 = vmatprep.subr.mxu0 0.0
    %1221 = vmatpush1.xpose.msra.mxu0 0.0
    %1222 = vmatprep.subr.mxu0 0.0
    %1223 = vmatpush1.xpose.msra.mxu0 0.0
    %1224 = vmatprep.subr.mxu0 0.0
    %1225 = vmatpush1.xpose.msra.mxu0 0.0
    %1226 = vmatprep.subr.mxu0 0.0
    %1227 = vmatpush1.xpose.msra.mxu0 0.0
    %1228 = vmatprep.subr.mxu0 0.0
    %1229 = vmatpush1.xpose.msra.mxu0 0.0
    %1230 = vmatprep.subr.mxu0 0.0
    %1231 = vmatpush1.xpose.msra.mxu0 0.0
    %1232 = vmatprep.subr.mxu0 0.0
    %1233 = vmatpush1.xpose.msra.mxu0 0.0
    %1234 = vmatprep.subr.mxu0 0.0
    %1235 = vmatpush1.xpose.msra.mxu0 0.0
    %1236 = vmatprep.subr.mxu0 0.0
    %1237 = vmatpush1.xpose.msra.mxu0 0.0
    %1238 = vmatprep.subr.mxu0 0.0
    %1239 = vmatpush1.xpose.msra.mxu0 0.0
    %1240 = vmatprep.subr.mxu0 0.0
    %1241 = vmatpush1.xpose.msra.mxu0 0.0
    %1242 = vmatprep.subr.mxu0 0.0
    %1243 = vmatpush1.xpose.msra.mxu0 0.0
    %1244 = vmatprep.subr.mxu0 0.0
    %1245 = vmatpush1.xpose.msra.mxu0 0.0
    %1246 = vmatprep.subr.mxu0 0.0
    %1247 = vmatpush1.xpose.msra.mxu0 0.0
    %1248 = vmatprep.subr.mxu0 0.0
    %1249 = vmatpush1.xpose.msra.mxu0 0.0
    %1250 = vmatprep.subr.mxu0 0.0
    %1251 = vmatpush1.xpose.msra.mxu0 0.0
    %1252 = vmatprep.subr.mxu0 0.0
    %1253 = vmatpush1.xpose.msra.mxu0 0.0
    %1254 = vmatprep.subr.mxu0 0.0
    %1255 = vmatpush1.xpose.msra.mxu0 0.0
    %1256 = vmatprep.subr.mxu0 0.0
    %1257 = vmatpush1.xpose.msra.mxu0 0.0
    %1258 = vmatprep.subr.mxu0 0.0
    %1259 = vmatpush1.xpose.msra.mxu0 0.0
    %1260 = vmatprep.mubr.f32.mxu0 0.0
    %v1261 = vand.u32 %v964, 4294901760
    %v1262 = vsub.f32 %v964, %v1261
    %v1263 = vand.u32 %v1262, 4294901760
    %1264 = vmatmul.mubr.f32.gmra.mrb[0].mxu0 %v1263
    %v1265 = vpop.f32.mrb[0].mxu0
    %v1266 = vadd.f32 %v1192, %v1265
    %v1267 = vpop.f32.mrb[0].mxu0
    %1268 = vdwg.mxu0
    %1269 = vmatprep.subr.mxu0 0.0
    %v1270 = vand.u32 %v967, 4294901760
    %v1271 = vsub.f32 %v967, %v1270
    %v1272 = vand.u32 %v1271, 4294901760
    %1273 = vmatpush1.xpose.msra.mxu0 %v1272
    %1274 = vmatprep.subr.mxu0 0.0
    %1275 = vmatpush1.xpose.msra.mxu0 0.0
    %1276 = vmatprep.subr.mxu0 0.0
    %1277 = vmatpush1.xpose.msra.mxu0 0.0
    %1278 = vmatprep.subr.mxu0 0.0
    %1279 = vmatpush1.xpose.msra.mxu0 0.0
    %1280 = vmatprep.subr.mxu0 0.0
    %1281 = vmatpush1.xpose.msra.mxu0 0.0
    %1282 = vmatprep.subr.mxu0 0.0
    %1283 = vmatpush1.xpose.msra.mxu0 0.0
    %1284 = vmatprep.subr.mxu0 0.0
    %1285 = vmatpush1.xpose.msra.mxu0 0.0
    %1286 = vmatprep.subr.mxu0 0.0
    %1287 = vmatpush1.xpose.msra.mxu0 0.0
    %1288 = vmatprep.subr.mxu0 0.0
    %1289 = vmatpush1.xpose.msra.mxu0 0.0
    %1290 = vmatprep.subr.mxu0 0.0
    %1291 = vmatpush1.xpose.msra.mxu0 0.0
    %1292 = vmatprep.subr.mxu0 0.0
    %1293 = vmatpush1.xpose.msra.mxu0 0.0
    %1294 = vmatprep.subr.mxu0 0.0
    %1295 = vmatpush1.xpose.msra.mxu0 0.0
    %1296 = vmatprep.subr.mxu0 0.0
    %1297 = vmatpush1.xpose.msra.mxu0 0.0
    %1298 = vmatprep.subr.mxu0 0.0
    %1299 = vmatpush1.xpose.msra.mxu0 0.0
    %1300 = vmatprep.subr.mxu0 0.0
    %1301 = vmatpush1.xpose.msra.mxu0 0.0
    %1302 = vmatprep.subr.mxu0 0.0
    %1303 = vmatpush1.xpose.msra.mxu0 0.0
    %1304 = vmatprep.subr.mxu0 0.0
    %1305 = vmatpush1.xpose.msra.mxu0 0.0
    %1306 = vmatprep.subr.mxu0 0.0
    %1307 = vmatpush1.xpose.msra.mxu0 0.0
    %1308 = vmatprep.subr.mxu0 0.0
    %1309 = vmatpush1.xpose.msra.mxu0 0.0
    %1310 = vmatprep.subr.mxu0 0.0
    %1311 = vmatpush1.xpose.msra.mxu0 0.0
    %1312 = vmatprep.subr.mxu0 0.0
    %1313 = vmatpush1.xpose.msra.mxu0 0.0
    %1314 = vmatprep.subr.mxu0 0.0
    %1315 = vmatpush1.xpose.msra.mxu0 0.0
    %1316 = vmatprep.subr.mxu0 0.0
    %1317 = vmatpush1.xpose.msra.mxu0 0.0
    %1318 = vmatprep.subr.mxu0 0.0
    %1319 = vmatpush1.xpose.msra.mxu0 0.0
    %1320 = vmatprep.subr.mxu0 0.0
    %1321 = vmatpush1.xpose.msra.mxu0 0.0
    %1322 = vmatprep.subr.mxu0 0.0
    %1323 = vmatpush1.xpose.msra.mxu0 0.0
    %1324 = vmatprep.subr.mxu0 0.0
    %1325 = vmatpush1.xpose.msra.mxu0 0.0
    %1326 = vmatprep.subr.mxu0 0.0
    %1327 = vmatpush1.xpose.msra.mxu0 0.0
    %1328 = vmatprep.subr.mxu0 0.0
    %1329 = vmatpush1.xpose.msra.mxu0 0.0
    %1330 = vmatprep.subr.mxu0 0.0
    %1331 = vmatpush1.xpose.msra.mxu0 0.0
    %1332 = vmatprep.subr.mxu0 0.0
    %1333 = vmatpush1.xpose.msra.mxu0 0.0
    %1334 = vmatprep.subr.mxu0 0.0
    %1335 = vmatpush1.xpose.msra.mxu0 0.0
    %1336 = vmatprep.mubr.f32.mxu0 0.0
    %v1337 = vand.u32 %v964, 4294901760
    %1338 = vmatmul.mubr.f32.gmra.mrb[0].mxu0 %v1337
    %v1339 = vpop.f32.mrb[0].mxu0
    %v1340 = vadd.f32 %v1266, %v1339
    %v1341 = vpop.f32.mrb[0].mxu0
    %1342 = vdwg.mxu0
    %1343 = vmatprep.subr.mxu0 0.0
    %v1344 = vand.u32 %v967, 4294901760
    %1345 = vmatpush1.xpose.msra.mxu0 %v1344
    %1346 = vmatprep.subr.mxu0 0.0
    %1347 = vmatpush1.xpose.msra.mxu0 0.0
    %1348 = vmatprep.subr.mxu0 0.0
    %1349 = vmatpush1.xpose.msra.mxu0 0.0
    %1350 = vmatprep.subr.mxu0 0.0
    %1351 = vmatpush1.xpose.msra.mxu0 0.0
    %1352 = vmatprep.subr.mxu0 0.0
    %1353 = vmatpush1.xpose.msra.mxu0 0.0
    %1354 = vmatprep.subr.mxu0 0.0
    %1355 = vmatpush1.xpose.msra.mxu0 0.0
    %1356 = vmatprep.subr.mxu0 0.0
    %1357 = vmatpush1.xpose.msra.mxu0 0.0
    %1358 = vmatprep.subr.mxu0 0.0
    %1359 = vmatpush1.xpose.msra.mxu0 0.0
    %1360 = vmatprep.subr.mxu0 0.0
    %1361 = vmatpush1.xpose.msra.mxu0 0.0
    %1362 = vmatprep.subr.mxu0 0.0
    %1363 = vmatpush1.xpose.msra.mxu0 0.0
    %1364 = vmatprep.subr.mxu0 0.0
    %1365 = vmatpush1.xpose.msra.mxu0 0.0
    %1366 = vmatprep.subr.mxu0 0.0
    %1367 = vmatpush1.xpose.msra.mxu0 0.0
    %1368 = vmatprep.subr.mxu0 0.0
    %1369 = vmatpush1.xpose.msra.mxu0 0.0
    %1370 = vmatprep.subr.mxu0 0.0
    %1371 = vmatpush1.xpose.msra.mxu0 0.0
    %1372 = vmatprep.subr.mxu0 0.0
    %1373 = vmatpush1.xpose.msra.mxu0 0.0
    %1374 = vmatprep.subr.mxu0 0.0
    %1375 = vmatpush1.xpose.msra.mxu0 0.0
    %1376 = vmatprep.subr.mxu0 0.0
    %1377 = vmatpush1.xpose.msra.mxu0 0.0
    %1378 = vmatprep.subr.mxu0 0.0
    %1379 = vmatpush1.xpose.msra.mxu0 0.0
    %1380 = vmatprep.subr.mxu0 0.0
    %1381 = vmatpush1.xpose.msra.mxu0 0.0
    %1382 = vmatprep.subr.mxu0 0.0
    %1383 = vmatpush1.xpose.msra.mxu0 0.0
    %1384 = vmatprep.subr.mxu0 0.0
    %1385 = vmatpush1.xpose.msra.mxu0 0.0
    %1386 = vmatprep.subr.mxu0 0.0
    %1387 = vmatpush1.xpose.msra.mxu0 0.0
    %1388 = vmatprep.subr.mxu0 0.0
    %1389 = vmatpush1.xpose.msra.mxu0 0.0
    %1390 = vmatprep.subr.mxu0 0.0
    %1391 = vmatpush1.xpose.msra.mxu0 0.0
    %1392 = vmatprep.subr.mxu0 0.0
    %1393 = vmatpush1.xpose.msra.mxu0 0.0
    %1394 = vmatprep.subr.mxu0 0.0
    %1395 = vmatpush1.xpose.msra.mxu0 0.0
    %1396 = vmatprep.subr.mxu0 0.0
    %1397 = vmatpush1.xpose.msra.mxu0 0.0
    %1398 = vmatprep.subr.mxu0 0.0
    %1399 = vmatpush1.xpose.msra.mxu0 0.0
    %1400 = vmatprep.subr.mxu0 0.0
    %1401 = vmatpush1.xpose.msra.mxu0 0.0
    %1402 = vmatprep.subr.mxu0 0.0
    %1403 = vmatpush1.xpose.msra.mxu0 0.0
    %1404 = vmatprep.subr.mxu0 0.0
    %1405 = vmatpush1.xpose.msra.mxu0 0.0
    %1406 = vmatprep.subr.mxu0 0.0
    %1407 = vmatpush1.xpose.msra.mxu0 0.0
    %1408 = vmatprep.mubr.f32.mxu0 0.0
    %v1409 = vand.u32 %v964, 4294901760
    %1410 = vmatmul.mubr.f32.gmra.mrb[0].mxu0 %v1409
    %v1411 = vpop.f32.mrb[0].mxu0
    %v1412 = vadd.f32 %v1340, %v1411
    %v1413 = vpop.f32.mrb[0].mxu0
    %1414 = vdwg.mxu0
    %v1415 = vxor.u32 %v1412, 2147483648
    %v1416 = vmul.f32 %v1415, 1.442695
    %v1417 = vpow.pop %v1416
    %v1418 = vadd.f32 %v1417, 1.0
    %v1419 = vrcp.pop %v1418
    %v1420 = vmul.f32 1.0, %v1419
    %v1423 = vunpack.c.l.s4 1966171168
    %v1424 = vunpack.c.0.s8 %v1423
    %v1425 = vlaneseq
    %v1426 = vshrl.u32 %v1425, 7
    %v1427 = vsub.s32 %v1424, %v1426
    %v1428 = vrot.slane %v1420, %v1427
    %v1429 = vcombine.high %v1428, %v1428
    %v1431 = vunpack.c.l.s4 1966171168
    %v1432 = vunpack.c.0.s8 %v1431
    %v1433 = vlaneseq
    %v1434 = vshrl.u32 %v1433, 7
    %v1435 = vsub.s32 %v1432, %v1434
    %v1436 = vrot.slane %v1428, %v1435
    %v1438 = vunpack.c.l.s4 1966171168
    %v1439 = vunpack.c.0.s8 %v1438
    %v1440 = vlaneseq
    %v1441 = vshrl.u32 %v1440, 7
    %v1442 = vsub.s32 %v1439, %v1441
    %v1443 = vrot.slane %v1429, %v1442
    %vm1446 = vcmask 57344
    %1447 = vst.msk [vmem:[#allocation2] sm:$0x1] %vm1446, %v1436
    %1448 = vst.msk [vmem:[#allocation2 + $0x1] sm:$0x1] %vm1446, %v1443
    // Predicated region
    $region14: #{channel_attention.1} parent=1 // pred_check
      _
    $region15: #{channel_attention.1} parent=1 // pred_check_branch
      %1450 = sbr.rel (0) target = $region17
    $region16: #{channel_attention.1} parent=1 // pred_region
      %s1452 = ssub.s32 32, 32
      %1453 = vsyncadd [#allocation3], %s1452
      %s1454 = sshll.u32 [#allocation2], 4
      %s1455 = int_to_ptr.vmem [resolvable:$true] %s1454
      %1460 = dma.vmem_to_hbm [thread:$0]  %s1455, 32, %s3, [#allocation3], 16, 16, 1
    $region17: #{channel_attention.1} parent=1 // pred_fallthru
      _
    // Predicated region
    $region18: #{channel_attention.1} parent=1 // pred_check
      _
    $region19: #{channel_attention.1} parent=1 // pred_check_branch
      %1462 = sbr.rel (0) target = $region21
    $region20: #{channel_attention.1} parent=1 // pred_region
      %1463 = dma.done [#allocation3], 32
    $region21: #{channel_attention.1} parent=1 // pred_fallthru
      _
    %1464 = vsyncpa [#allocation3], 1

</llo_original>
